<compile_context>
chip_gen: v7x
topology: tpu7x:2x2x1
jax: 0.10.0
libtpu: 0.0.40
codegen_flags: <defaults>
</compile_context>

<pallas_src>
import functools

import jax
import jax.numpy as jnp
from jax import lax
from jax.experimental import pallas as pl
from jax.experimental.pallas import tpu as pltpu


_VMEM_LIMIT = 32 * 1024 * 1024      # explicit scoped-VMEM limit (safe on all gens)
_TILE_BUDGET = 16 * 1024 * 1024     # conservative budget used to derive tile sizes


def _sigmoid(x):
    # sigmoid(x) = 0.5*(1 + tanh(0.5*x)): one EUP push instead of exp+recip.
    return 0.5 * jnp.tanh(0.5 * x) + 0.5


def _pick_block(total, cap, multiple=1):
    """Largest divisor of `total` that is <= cap and a multiple of `multiple`.

    Falls back to `total` (full dim, always layout-legal) if no such divisor
    exists.  Degenerate case (e.g. prime T -> t_chunk=1) is correct but slow.
    """
    cap = max(1, min(cap, total))
    if total <= cap:
        return total
    divs = [d for d in range(multiple, cap + 1, multiple) if total % d == 0]
    return max(divs) if divs else total


# ---------------------------------------------------------------------------
# Kernel 1: hoisted input projection   [emb @ (W_ih_f | W_ih_b)] + bias
#   One wide bf16 MXU matmul per row block; output split into two bf16 slabs
#   (fwd gates, bwd gates) so kernel 2 can stream them with different time
#   directions via index_map alone.
# ---------------------------------------------------------------------------
def _input_proj_kernel(x_ref, w_ref, b_ref, of_ref, ob_ref):
    # x_ref: [m_blk, E] bf16, w_ref: [E, 8*Hd] bf16, b_ref: [1, 8*Hd] f32
    # of_ref/ob_ref: [m_blk, 4*Hd] bf16
    g4 = of_ref.shape[1]
    y = jnp.dot(x_ref[...], w_ref[...], preferred_element_type=jnp.float32)
    y = (y + b_ref[...]).astype(of_ref.dtype)
    of_ref[...] = y[:, :g4]
    ob_ref[...] = y[:, g4:]


# ---------------------------------------------------------------------------
# Kernel 2: sequential LSTM recurrence, both directions per step.
#   gxf streams ascending in time, gxb streams descending (block index
#   n_chunks-1-i) so the backward direction's reversal costs nothing.
# ---------------------------------------------------------------------------
def _recurrence_kernel(gxf_ref, gxb_ref, whf_ref, whb_ref, out_ref,
                       hf_sc, cf_sc, hb_sc, cb_sc):
    # gxf_ref/gxb_ref: [t_chunk, B, 4*Hd] bf16 precomputed input gates (+bias)
    # whf_ref/whb_ref: [Hd, 4*Hd] bf16 recurrent weights (per direction)
    # out_ref:         [B, 2*Hd] f32 = [h_fwd_final | h_bwd_final]
    # *_sc:            [B, Hd] f32 VMEM scratch, persistent across chunks
    tb = pl.program_id(0)

    @pl.when(tb == 0)
    def _():
        for sc in (hf_sc, cf_sc, hb_sc, cb_sc):
            sc[...] = jnp.zeros_like(sc)

    t_chunk = gxf_ref.shape[0]
    hd = whf_ref.shape[0]
    whf = whf_ref[...]        # hoisted, VMEM-resident bf16
    whb = whb_ref[...]

    def lstm_step(gx_bf16, h, c, wh):
        # Tiny latency-bound dot; bf16 h-cast keeps the MXU fast path.
        # (f32 state/cell/nonlinearities preserve accuracy; bf16 rounding of h
        #  is validated against the f32 reference at the target T.)
        gates = gx_bf16.astype(jnp.float32) + jnp.dot(
            h.astype(wh.dtype), wh, preferred_element_type=jnp.float32)
        i = _sigmoid(gates[:, 0 * hd:1 * hd])
        f = _sigmoid(gates[:, 1 * hd:2 * hd])
        g = jnp.tanh(gates[:, 2 * hd:3 * hd])
        o = _sigmoid(gates[:, 3 * hd:4 * hd])
        c = f * c + i * g
        h = o * jnp.tanh(c)
        return h, c

    def body(t, carry):
        hf, cf, hb, cb = carry
        hf, cf = lstm_step(gxf_ref[t], hf, cf, whf)
        hb, cb = lstm_step(gxb_ref[t_chunk - 1 - t], hb, cb, whb)
        return hf, cf, hb, cb

    carry0 = (hf_sc[...], cf_sc[...], hb_sc[...], cb_sc[...])
    # Full unroll (t_chunk <= 32): lets the scheduler hide the next step's gx
    # load / weight push under the current step's EUP/VPU tail.
    hf, cf, hb, cb = lax.fori_loop(0, t_chunk, body, carry0, unroll=True)
    hf_sc[...] = hf
    cf_sc[...] = cf
    hb_sc[...] = hb
    cb_sc[...] = cb

    @pl.when(tb == pl.num_programs(0) - 1)
    def _():
        # == torch.cat([h[0], h[1]], dim=1)
        out_ref[...] = jnp.concatenate([hf, hb], axis=-1)


# ---------------------------------------------------------------------------
# Wrapper
# ---------------------------------------------------------------------------
def bilstm_encoder_pallas(x_ids, word_embeddings, params, hidden_dim):
    """x_ids: [B, T] int32 indices. Returns [B, hidden_dim] float32."""
    B, T = x_ids.shape
    Hd = hidden_dim // 2
    G4 = 4 * Hd
    E = word_embeddings.shape[1]
    M = T * B

    # --- Embedding gather, time-major (transpose the tiny [B,T] index array,
    #     not the [T*B,E] activation), bf16 to halve HBM traffic. -------------
    emb_tab = word_embeddings.astype(jnp.bfloat16)
    ids_tm = jnp.transpose(x_ids).reshape(-1)            # [T*B] (row = t*B + b)
    emb_tm = jnp.take(emb_tab, ids_tm, axis=0)           # [T*B, E] bf16

    # --- Fused input weights/bias (direction-major: [fwd 4Hd | bwd 4Hd]) -----
    w_x = jnp.concatenate([params["wih_f"], params["wih_b"]],
                          axis=1).astype(jnp.bfloat16)   # [E, 8Hd]
    bias = jnp.concatenate([params["b_f"], params["b_b"]],
                           axis=1).astype(jnp.float32)   # [1, 8Hd] (b_ih+b_hh)
    whh_f = params["whh_f"].astype(jnp.bfloat16)         # [Hd, 4Hd]
    whh_b = params["whh_b"].astype(jnp.bfloat16)         # [Hd, 4Hd]

    # --- Kernel 1: input projection, grid-pipelined over rows ---------------
    # Per-row double-buffered VMEM: 2*(E*2) input + 2*(8Hd*2) output bytes.
    m_cap = max(8, _TILE_BUDGET // (4 * E + 32 * Hd))
    m_blk = _pick_block(M, min(m_cap, 2048), multiple=8)
    assert M % m_blk == 0

    gxf, gxb = pl.pallas_call(
        _input_proj_kernel,
        out_shape=(jax.ShapeDtypeStruct((M, G4), jnp.bfloat16),
                   jax.ShapeDtypeStruct((M, G4), jnp.bfloat16)),
        grid=(M // m_blk,),
        in_specs=[
            pl.BlockSpec((m_blk, E), lambda i: (i, 0)),
            pl.BlockSpec((E, 2 * G4), lambda i: (0, 0)),
            pl.BlockSpec((1, 2 * G4), lambda i: (0, 0)),
        ],
        out_specs=(pl.BlockSpec((m_blk, G4), lambda i: (i, 0)),
                   pl.BlockSpec((m_blk, G4), lambda i: (i, 0))),
        compiler_params=pltpu.CompilerParams(
            dimension_semantics=("parallel",),
            vmem_limit_bytes=_VMEM_LIMIT),
    )(emb_tm, w_x, bias)

    gxf = gxf.reshape(T, B, G4)   # free reshapes: rows already time-major
    gxb = gxb.reshape(T, B, G4)

    # --- Kernel 2: recurrence, time-chunked & pipelined ----------------------
    # Per-time-step double-buffered VMEM for the two bf16 gate streams:
    #   2 streams * 2 buffers * B * 4Hd * 2 bytes = 32*B*Hd bytes.
    t_cap = max(1, _TILE_BUDGET // (32 * B * Hd))
    t_chunk = _pick_block(T, min(32, t_cap), multiple=1)
    assert T % t_chunk == 0
    n_chunks = T // t_chunk

    out = pl.pallas_call(
        _recurrence_kernel,
        out_shape=jax.ShapeDtypeStruct((B, 2 * Hd), jnp.float32),
        grid=(n_chunks,),
        in_specs=[
            pl.BlockSpec((t_chunk, B, G4), lambda i: (i, 0, 0)),
            # Backward direction: descending chunk order -> reversal is pure
            # index_map plumbing (no HBM flip pass).
            pl.BlockSpec((t_chunk, B, G4), lambda i: (n_chunks - 1 - i, 0, 0)),
            pl.BlockSpec((Hd, G4), lambda i: (0, 0)),
            pl.BlockSpec((Hd, G4), lambda i: (0, 0)),
        ],
        out_specs=pl.BlockSpec((B, 2 * Hd), lambda i: (0, 0)),
        scratch_shapes=[pltpu.VMEM((B, Hd), jnp.float32)] * 4,
        compiler_params=pltpu.CompilerParams(
            dimension_semantics=("arbitrary",),
            vmem_limit_bytes=_VMEM_LIMIT),
    )(gxf, gxb, whh_f, whh_b)
    return out


# ---------------------------------------------------------------------------
# Pure-JAX f32 reference (mirrors torch.nn.LSTM, gate order i,f,g,o)
# ---------------------------------------------------------------------------
def _reference_bilstm(x_ids, word_embeddings, params, hidden_dim):
    Hd = hidden_dim // 2
    emb = jnp.take(word_embeddings, x_ids, axis=0).astype(jnp.float32)  # [B,T,E]
    B = emb.shape[0]

    def run_dir(seq, wih, whh, b):
        def step(carry, x_t):
            h, c = carry
            gates = x_t @ wih + h @ whh + b
            i = jax.nn.sigmoid(gates[:, 0 * Hd:1 * Hd])
            f = jax.nn.sigmoid(gates[:, 1 * Hd:2 * Hd])
            g = jnp.tanh(gates[:, 2 * Hd:3 * Hd])
            o = jax.nn.sigmoid(gates[:, 3 * Hd:4 * Hd])
            c = f * c + i * g
            h = o * jnp.tanh(c)
            return (h, c), None

        h0 = jnp.zeros((B, Hd), jnp.float32)
        (h, _), _ = lax.scan(step, (h0, h0), jnp.transpose(seq, (1, 0, 2)))
        return h

    h_f = run_dir(emb, params["wih_f"], params["whh_f"], params["b_f"][0])
    h_b = run_dir(emb[:, ::-1, :], params["wih_b"], params["whh_b"], params["b_b"][0])
    return jnp.concatenate([h_f, h_b], axis=1)


if __name__ == "__main__":
    # Small, deterministic config.
    VOCAB, EMB_DIM = 50, 300
    HIDDEN_DIM = 32           # per-direction hidden = 16
    B, T = 2, 8
    Hd = HIDDEN_DIM // 2

    key = jax.random.PRNGKey(0)
    k_emb, k1, k2, k3, k4, k5, k6, k_x = jax.random.split(key, 8)

    # Frozen pretrained embedding table (padding_idx=1: from_pretrained keeps
    # the provided values and only affects gradients, so no zeroing needed).
    word_embeddings = 0.1 * jax.random.normal(k_emb, (VOCAB, EMB_DIM), jnp.float32)

    # LSTM parameters (PyTorch shapes transposed for right-multiplication).
    # torch: weight_ih [4H, E], weight_hh [4H, H], b_ih [4H], b_hh [4H]
    params = {
        "wih_f": 0.1 * jax.random.normal(k1, (EMB_DIM, 4 * Hd), jnp.float32),
        "whh_f": 0.1 * jax.random.normal(k2, (Hd, 4 * Hd), jnp.float32),
        "b_f": 0.1 * jax.random.normal(k3, (1, 4 * Hd), jnp.float32),  # b_ih+b_hh folded
        "wih_b": 0.1 * jax.random.normal(k4, (EMB_DIM, 4 * Hd), jnp.float32),
        "whh_b": 0.1 * jax.random.normal(k5, (Hd, 4 * Hd), jnp.float32),
        "b_b": 0.1 * jax.random.normal(k6, (1, 4 * Hd), jnp.float32),
    }

    x_ids = jax.random.randint(k_x, (B, T), 0, VOCAB, dtype=jnp.int32)

    run = jax.jit(functools.partial(bilstm_encoder_pallas, hidden_dim=HIDDEN_DIM))
    out = run(x_ids, word_embeddings, params)
    out = jax.block_until_ready(out)
    assert out.shape == (B, HIDDEN_DIM), out.shape

    # bf16 matmul inputs / bf16 gx storage vs f32 reference -> relaxed tolerance.
    ref = _reference_bilstm(x_ids, word_embeddings, params, HIDDEN_DIM)
    assert jnp.allclose(out, ref, atol=1e-2, rtol=1e-2), (
        float(jnp.max(jnp.abs(out - ref))))

    print("KERNEL_OK")
</pallas_src>

<mosaic_0001>
module attributes {stable_mosaic.version = 11 : i64} {
  func.func @_recurrence_kernel(%arg0: i32, %arg1: memref<8x2x64xbf16, #tpu.memory_space<vmem>>, %arg2: memref<8x2x64xbf16, #tpu.memory_space<vmem>>, %arg3: memref<16x64xbf16, #tpu.memory_space<vmem>>, %arg4: memref<16x64xbf16, #tpu.memory_space<vmem>>, %arg5: memref<2x32xf32, #tpu.memory_space<vmem>>, %arg6: memref<2x16xf32, #tpu.memory_space<vmem>>, %arg7: memref<2x16xf32, #tpu.memory_space<vmem>>, %arg8: memref<2x16xf32, #tpu.memory_space<vmem>>, %arg9: memref<2x16xf32, #tpu.memory_space<vmem>>) attributes {dimension_semantics = [#tpu.dimension_semantics<arbitrary>], iteration_bounds = array<i64: 1>, scalar_prefetch = 0 : i64, scratch_operands = 4 : i64, tpu.core_type = #tpu.core_type<tc>, window_params = [{transform_indices = @transform_0, window_bounds = array<i64: 8, 2, 64>}, {transform_indices = @transform_1, window_bounds = array<i64: 8, 2, 64>}, {pipeline_mode = #tpu.pipeline_mode<synchronous>, transform_indices = @transform_2, window_bounds = array<i64: 16, 64>}, {pipeline_mode = #tpu.pipeline_mode<synchronous>, transform_indices = @transform_3, window_bounds = array<i64: 16, 64>}, {pipeline_mode = #tpu.pipeline_mode<synchronous>, transform_indices = @transform_4, window_bounds = array<i64: 2, 32>}]} {
    %c0_i32 = arith.constant 0 : i32
    %0 = arith.cmpi eq, %arg0, %c0_i32 : i32
    %1 = arith.extui %0 : i1 to i32
    %c0_i32_0 = arith.constant 0 : i32
    %2 = arith.cmpi ne, %1, %c0_i32_0 : i32
    scf.if %2 {
      %cst_222 = arith.constant 0.000000e+00 : f32
      %632 = vector.broadcast %cst_222 : f32 to vector<2x16xf32>
      %c0_223 = arith.constant 0 : index
      %c0_224 = arith.constant 0 : index
      %633 = vector.load %arg6[%c0_223, %c0_224] : memref<2x16xf32, #tpu.memory_space<vmem>>, vector<2x16xf32>
      tpu.vector_store %arg6[%c0_223, %c0_224], %632 {strides = array<i32>} : memref<2x16xf32, #tpu.memory_space<vmem>>, vector<2x16xf32>,
      %cst_225 = arith.constant 0.000000e+00 : f32
      %634 = vector.broadcast %cst_225 : f32 to vector<2x16xf32>
      %c0_226 = arith.constant 0 : index
      %c0_227 = arith.constant 0 : index
      %635 = vector.load %arg7[%c0_226, %c0_227] : memref<2x16xf32, #tpu.memory_space<vmem>>, vector<2x16xf32>
      tpu.vector_store %arg7[%c0_226, %c0_227], %634 {strides = array<i32>} : memref<2x16xf32, #tpu.memory_space<vmem>>, vector<2x16xf32>,
      %cst_228 = arith.constant 0.000000e+00 : f32
      %636 = vector.broadcast %cst_228 : f32 to vector<2x16xf32>
      %c0_229 = arith.constant 0 : index
      %c0_230 = arith.constant 0 : index
      %637 = vector.load %arg8[%c0_229, %c0_230] : memref<2x16xf32, #tpu.memory_space<vmem>>, vector<2x16xf32>
      tpu.vector_store %arg8[%c0_229, %c0_230], %636 {strides = array<i32>} : memref<2x16xf32, #tpu.memory_space<vmem>>, vector<2x16xf32>,
      %cst_231 = arith.constant 0.000000e+00 : f32
      %638 = vector.broadcast %cst_231 : f32 to vector<2x16xf32>
      %c0_232 = arith.constant 0 : index
      %c0_233 = arith.constant 0 : index
      %639 = vector.load %arg9[%c0_232, %c0_233] : memref<2x16xf32, #tpu.memory_space<vmem>>, vector<2x16xf32>
      tpu.vector_store %arg9[%c0_232, %c0_233], %638 {strides = array<i32>} : memref<2x16xf32, #tpu.memory_space<vmem>>, vector<2x16xf32>,
    } else {
    }
    %c0 = arith.constant 0 : index
    %c0_1 = arith.constant 0 : index
    %3 = vector.load %arg3[%c0, %c0_1] : memref<16x64xbf16, #tpu.memory_space<vmem>>, vector<16x64xbf16>
    %c0_2 = arith.constant 0 : index
    %c0_3 = arith.constant 0 : index
    %4 = vector.load %arg4[%c0_2, %c0_3] : memref<16x64xbf16, #tpu.memory_space<vmem>>, vector<16x64xbf16>
    %c0_4 = arith.constant 0 : index
    %c0_5 = arith.constant 0 : index
    %5 = vector.load %arg6[%c0_4, %c0_5] : memref<2x16xf32, #tpu.memory_space<vmem>>, vector<2x16xf32>
    %c0_6 = arith.constant 0 : index
    %c0_7 = arith.constant 0 : index
    %6 = vector.load %arg7[%c0_6, %c0_7] : memref<2x16xf32, #tpu.memory_space<vmem>>, vector<2x16xf32>
    %c0_8 = arith.constant 0 : index
    %c0_9 = arith.constant 0 : index
    %7 = vector.load %arg8[%c0_8, %c0_9] : memref<2x16xf32, #tpu.memory_space<vmem>>, vector<2x16xf32>
    %c0_10 = arith.constant 0 : index
    %c0_11 = arith.constant 0 : index
    %8 = vector.load %arg9[%c0_10, %c0_11] : memref<2x16xf32, #tpu.memory_space<vmem>>, vector<2x16xf32>
    %c0_i32_12 = arith.constant 0 : i32
    %9 = arith.index_cast %c0_i32_12 : i32 to index
    %c0_13 = arith.constant 0 : index
    %c0_14 = arith.constant 0 : index
    %10 = vector.load %arg1[%9, %c0_13, %c0_14] : memref<8x2x64xbf16, #tpu.memory_space<vmem>>, vector<1x2x64xbf16>
    %11 = vector.shape_cast %10 : vector<1x2x64xbf16> to vector<2x64xbf16>
    %12 = arith.extf %11 : vector<2x64xbf16> to vector<2x64xf32>
    %13 = arith.truncf %5 : vector<2x16xf32> to vector<2x16xbf16>
    %cst = arith.constant dense<0.000000e+00> : vector<2x64xf32>
    %14 = tpu.matmul %13, %3, %cst {dimension_numbers = #tpu.dot_dimension_numbers<[1], [0], [0], [1], [0, 0, 1, 1], [], []>} : vector<2x16xbf16>, vector<16x64xbf16>, vector<2x64xf32> -> vector<2x64xf32>
    %15 = arith.addf %12, %14 : vector<2x64xf32>
    %16 = vector.extract_strided_slice %15 {offsets = [0, 0], sizes = [2, 16], strides = [1, 1]} : vector<2x64xf32> to vector<2x16xf32>
    %cst_15 = arith.constant 5.000000e-01 : f32
    %17 = vector.broadcast %cst_15 : f32 to vector<2x16xf32>
    %18 = arith.mulf %17, %16 : vector<2x16xf32>
    %19 = math.tanh %18 : vector<2x16xf32>
    %cst_16 = arith.constant 5.000000e-01 : f32
    %20 = vector.broadcast %cst_16 : f32 to vector<2x16xf32>
    %21 = arith.mulf %20, %19 : vector<2x16xf32>
    %cst_17 = arith.constant 5.000000e-01 : f32
    %22 = vector.broadcast %cst_17 : f32 to vector<2x16xf32>
    %23 = arith.addf %21, %22 : vector<2x16xf32>
    %24 = vector.extract_strided_slice %15 {offsets = [0, 16], sizes = [2, 16], strides = [1, 1]} : vector<2x64xf32> to vector<2x16xf32>
    %cst_18 = arith.constant 5.000000e-01 : f32
    %25 = vector.broadcast %cst_18 : f32 to vector<2x16xf32>
    %26 = arith.mulf %25, %24 : vector<2x16xf32>
    %27 = math.tanh %26 : vector<2x16xf32>
    %cst_19 = arith.constant 5.000000e-01 : f32
    %28 = vector.broadcast %cst_19 : f32 to vector<2x16xf32>
    %29 = arith.mulf %28, %27 : vector<2x16xf32>
    %cst_20 = arith.constant 5.000000e-01 : f32
    %30 = vector.broadcast %cst_20 : f32 to vector<2x16xf32>
    %31 = arith.addf %29, %30 : vector<2x16xf32>
    %32 = vector.extract_strided_slice %15 {offsets = [0, 32], sizes = [2, 16], strides = [1, 1]} : vector<2x64xf32> to vector<2x16xf32>
    %33 = math.tanh %32 : vector<2x16xf32>
    %34 = vector.extract_strided_slice %15 {offsets = [0, 48], sizes = [2, 16], strides = [1, 1]} : vector<2x64xf32> to vector<2x16xf32>
    %cst_21 = arith.constant 5.000000e-01 : f32
    %35 = vector.broadcast %cst_21 : f32 to vector<2x16xf32>
    %36 = arith.mulf %35, %34 : vector<2x16xf32>
    %37 = math.tanh %36 : vector<2x16xf32>
    %cst_22 = arith.constant 5.000000e-01 : f32
    %38 = vector.broadcast %cst_22 : f32 to vector<2x16xf32>
    %39 = arith.mulf %38, %37 : vector<2x16xf32>
    %cst_23 = arith.constant 5.000000e-01 : f32
    %40 = vector.broadcast %cst_23 : f32 to vector<2x16xf32>
    %41 = arith.addf %39, %40 : vector<2x16xf32>
    %42 = arith.mulf %31, %6 : vector<2x16xf32>
    %43 = arith.mulf %23, %33 : vector<2x16xf32>
    %44 = arith.addf %42, %43 : vector<2x16xf32>
    %45 = math.tanh %44 : vector<2x16xf32>
    %46 = arith.mulf %41, %45 : vector<2x16xf32>
    %c7_i32 = arith.constant 7 : i32
    %47 = arith.subi %c7_i32, %c0_i32_12 : i32
    %48 = arith.index_cast %47 : i32 to index
    %c0_24 = arith.constant 0 : index
    %c0_25 = arith.constant 0 : index
    %49 = vector.load %arg2[%48, %c0_24, %c0_25] : memref<8x2x64xbf16, #tpu.memory_space<vmem>>, vector<1x2x64xbf16>
    %50 = vector.shape_cast %49 : vector<1x2x64xbf16> to vector<2x64xbf16>
    %51 = arith.extf %50 : vector<2x64xbf16> to vector<2x64xf32>
    %52 = arith.truncf %7 : vector<2x16xf32> to vector<2x16xbf16>
    %cst_26 = arith.constant dense<0.000000e+00> : vector<2x64xf32>
    %53 = tpu.matmul %52, %4, %cst_26 {dimension_numbers = #tpu.dot_dimension_numbers<[1], [0], [0], [1], [0, 0, 1, 1], [], []>} : vector<2x16xbf16>, vector<16x64xbf16>, vector<2x64xf32> -> vector<2x64xf32>
    %54 = arith.addf %51, %53 : vector<2x64xf32>
    %55 = vector.extract_strided_slice %54 {offsets = [0, 0], sizes = [2, 16], strides = [1, 1]} : vector<2x64xf32> to vector<2x16xf32>
    %cst_27 = arith.constant 5.000000e-01 : f32
    %56 = vector.broadcast %cst_27 : f32 to vector<2x16xf32>
    %57 = arith.mulf %56, %55 : vector<2x16xf32>
    %58 = math.tanh %57 : vector<2x16xf32>
    %cst_28 = arith.constant 5.000000e-01 : f32
    %59 = vector.broadcast %cst_28 : f32 to vector<2x16xf32>
    %60 = arith.mulf %59, %58 : vector<2x16xf32>
    %cst_29 = arith.constant 5.000000e-01 : f32
    %61 = vector.broadcast %cst_29 : f32 to vector<2x16xf32>
    %62 = arith.addf %60, %61 : vector<2x16xf32>
    %63 = vector.extract_strided_slice %54 {offsets = [0, 16], sizes = [2, 16], strides = [1, 1]} : vector<2x64xf32> to vector<2x16xf32>
    %cst_30 = arith.constant 5.000000e-01 : f32
    %64 = vector.broadcast %cst_30 : f32 to vector<2x16xf32>
    %65 = arith.mulf %64, %63 : vector<2x16xf32>
    %66 = math.tanh %65 : vector<2x16xf32>
    %cst_31 = arith.constant 5.000000e-01 : f32
    %67 = vector.broadcast %cst_31 : f32 to vector<2x16xf32>
    %68 = arith.mulf %67, %66 : vector<2x16xf32>
    %cst_32 = arith.constant 5.000000e-01 : f32
    %69 = vector.broadcast %cst_32 : f32 to vector<2x16xf32>
    %70 = arith.addf %68, %69 : vector<2x16xf32>
    %71 = vector.extract_strided_slice %54 {offsets = [0, 32], sizes = [2, 16], strides = [1, 1]} : vector<2x64xf32> to vector<2x16xf32>
    %72 = math.tanh %71 : vector<2x16xf32>
    %73 = vector.extract_strided_slice %54 {offsets = [0, 48], sizes = [2, 16], strides = [1, 1]} : vector<2x64xf32> to vector<2x16xf32>
    %cst_33 = arith.constant 5.000000e-01 : f32
    %74 = vector.broadcast %cst_33 : f32 to vector<2x16xf32>
    %75 = arith.mulf %74, %73 : vector<2x16xf32>
    %76 = math.tanh %75 : vector<2x16xf32>
    %cst_34 = arith.constant 5.000000e-01 : f32
    %77 = vector.broadcast %cst_34 : f32 to vector<2x16xf32>
    %78 = arith.mulf %77, %76 : vector<2x16xf32>
    %cst_35 = arith.constant 5.000000e-01 : f32
    %79 = vector.broadcast %cst_35 : f32 to vector<2x16xf32>
    %80 = arith.addf %78, %79 : vector<2x16xf32>
    %81 = arith.mulf %70, %8 : vector<2x16xf32>
    %82 = arith.mulf %62, %72 : vector<2x16xf32>
    %83 = arith.addf %81, %82 : vector<2x16xf32>
    %84 = math.tanh %83 : vector<2x16xf32>
    %85 = arith.mulf %80, %84 : vector<2x16xf32>
    %c1_i32 = arith.constant 1 : i32
    %86 = arith.index_cast %c1_i32 : i32 to index
    %c0_36 = arith.constant 0 : index
    %c0_37 = arith.constant 0 : index
    %87 = vector.load %arg1[%86, %c0_36, %c0_37] : memref<8x2x64xbf16, #tpu.memory_space<vmem>>, vector<1x2x64xbf16>
    %88 = vector.shape_cast %87 : vector<1x2x64xbf16> to vector<2x64xbf16>
    %89 = arith.extf %88 : vector<2x64xbf16> to vector<2x64xf32>
    %90 = arith.truncf %46 : vector<2x16xf32> to vector<2x16xbf16>
    %cst_38 = arith.constant dense<0.000000e+00> : vector<2x64xf32>
    %91 = tpu.matmul %90, %3, %cst_38 {dimension_numbers = #tpu.dot_dimension_numbers<[1], [0], [0], [1], [0, 0, 1, 1], [], []>} : vector<2x16xbf16>, vector<16x64xbf16>, vector<2x64xf32> -> vector<2x64xf32>
    %92 = arith.addf %89, %91 : vector<2x64xf32>
    %93 = vector.extract_strided_slice %92 {offsets = [0, 0], sizes = [2, 16], strides = [1, 1]} : vector<2x64xf32> to vector<2x16xf32>
    %cst_39 = arith.constant 5.000000e-01 : f32
    %94 = vector.broadcast %cst_39 : f32 to vector<2x16xf32>
    %95 = arith.mulf %94, %93 : vector<2x16xf32>
    %96 = math.tanh %95 : vector<2x16xf32>
    %cst_40 = arith.constant 5.000000e-01 : f32
    %97 = vector.broadcast %cst_40 : f32 to vector<2x16xf32>
    %98 = arith.mulf %97, %96 : vector<2x16xf32>
    %cst_41 = arith.constant 5.000000e-01 : f32
    %99 = vector.broadcast %cst_41 : f32 to vector<2x16xf32>
    %100 = arith.addf %98, %99 : vector<2x16xf32>
    %101 = vector.extract_strided_slice %92 {offsets = [0, 16], sizes = [2, 16], strides = [1, 1]} : vector<2x64xf32> to vector<2x16xf32>
    %cst_42 = arith.constant 5.000000e-01 : f32
    %102 = vector.broadcast %cst_42 : f32 to vector<2x16xf32>
    %103 = arith.mulf %102, %101 : vector<2x16xf32>
    %104 = math.tanh %103 : vector<2x16xf32>
    %cst_43 = arith.constant 5.000000e-01 : f32
    %105 = vector.broadcast %cst_43 : f32 to vector<2x16xf32>
    %106 = arith.mulf %105, %104 : vector<2x16xf32>
    %cst_44 = arith.constant 5.000000e-01 : f32
    %107 = vector.broadcast %cst_44 : f32 to vector<2x16xf32>
    %108 = arith.addf %106, %107 : vector<2x16xf32>
    %109 = vector.extract_strided_slice %92 {offsets = [0, 32], sizes = [2, 16], strides = [1, 1]} : vector<2x64xf32> to vector<2x16xf32>
    %110 = math.tanh %109 : vector<2x16xf32>
    %111 = vector.extract_strided_slice %92 {offsets = [0, 48], sizes = [2, 16], strides = [1, 1]} : vector<2x64xf32> to vector<2x16xf32>
    %cst_45 = arith.constant 5.000000e-01 : f32
    %112 = vector.broadcast %cst_45 : f32 to vector<2x16xf32>
    %113 = arith.mulf %112, %111 : vector<2x16xf32>
    %114 = math.tanh %113 : vector<2x16xf32>
    %cst_46 = arith.constant 5.000000e-01 : f32
    %115 = vector.broadcast %cst_46 : f32 to vector<2x16xf32>
    %116 = arith.mulf %115, %114 : vector<2x16xf32>
    %cst_47 = arith.constant 5.000000e-01 : f32
    %117 = vector.broadcast %cst_47 : f32 to vector<2x16xf32>
    %118 = arith.addf %116, %117 : vector<2x16xf32>
    %119 = arith.mulf %108, %44 : vector<2x16xf32>
    %120 = arith.mulf %100, %110 : vector<2x16xf32>
    %121 = arith.addf %119, %120 : vector<2x16xf32>
    %122 = math.tanh %121 : vector<2x16xf32>
    %123 = arith.mulf %118, %122 : vector<2x16xf32>
    %c7_i32_48 = arith.constant 7 : i32
    %124 = arith.subi %c7_i32_48, %c1_i32 : i32
    %125 = arith.index_cast %124 : i32 to index
    %c0_49 = arith.constant 0 : index
    %c0_50 = arith.constant 0 : index
    %126 = vector.load %arg2[%125, %c0_49, %c0_50] : memref<8x2x64xbf16, #tpu.memory_space<vmem>>, vector<1x2x64xbf16>
    %127 = vector.shape_cast %126 : vector<1x2x64xbf16> to vector<2x64xbf16>
    %128 = arith.extf %127 : vector<2x64xbf16> to vector<2x64xf32>
    %129 = arith.truncf %85 : vector<2x16xf32> to vector<2x16xbf16>
    %cst_51 = arith.constant dense<0.000000e+00> : vector<2x64xf32>
    %130 = tpu.matmul %129, %4, %cst_51 {dimension_numbers = #tpu.dot_dimension_numbers<[1], [0], [0], [1], [0, 0, 1, 1], [], []>} : vector<2x16xbf16>, vector<16x64xbf16>, vector<2x64xf32> -> vector<2x64xf32>
    %131 = arith.addf %128, %130 : vector<2x64xf32>
    %132 = vector.extract_strided_slice %131 {offsets = [0, 0], sizes = [2, 16], strides = [1, 1]} : vector<2x64xf32> to vector<2x16xf32>
    %cst_52 = arith.constant 5.000000e-01 : f32
    %133 = vector.broadcast %cst_52 : f32 to vector<2x16xf32>
    %134 = arith.mulf %133, %132 : vector<2x16xf32>
    %135 = math.tanh %134 : vector<2x16xf32>
    %cst_53 = arith.constant 5.000000e-01 : f32
    %136 = vector.broadcast %cst_53 : f32 to vector<2x16xf32>
    %137 = arith.mulf %136, %135 : vector<2x16xf32>
    %cst_54 = arith.constant 5.000000e-01 : f32
    %138 = vector.broadcast %cst_54 : f32 to vector<2x16xf32>
    %139 = arith.addf %137, %138 : vector<2x16xf32>
    %140 = vector.extract_strided_slice %131 {offsets = [0, 16], sizes = [2, 16], strides = [1, 1]} : vector<2x64xf32> to vector<2x16xf32>
    %cst_55 = arith.constant 5.000000e-01 : f32
    %141 = vector.broadcast %cst_55 : f32 to vector<2x16xf32>
    %142 = arith.mulf %141, %140 : vector<2x16xf32>
    %143 = math.tanh %142 : vector<2x16xf32>
    %cst_56 = arith.constant 5.000000e-01 : f32
    %144 = vector.broadcast %cst_56 : f32 to vector<2x16xf32>
    %145 = arith.mulf %144, %143 : vector<2x16xf32>
    %cst_57 = arith.constant 5.000000e-01 : f32
    %146 = vector.broadcast %cst_57 : f32 to vector<2x16xf32>
    %147 = arith.addf %145, %146 : vector<2x16xf32>
    %148 = vector.extract_strided_slice %131 {offsets = [0, 32], sizes = [2, 16], strides = [1, 1]} : vector<2x64xf32> to vector<2x16xf32>
    %149 = math.tanh %148 : vector<2x16xf32>
    %150 = vector.extract_strided_slice %131 {offsets = [0, 48], sizes = [2, 16], strides = [1, 1]} : vector<2x64xf32> to vector<2x16xf32>
    %cst_58 = arith.constant 5.000000e-01 : f32
    %151 = vector.broadcast %cst_58 : f32 to vector<2x16xf32>
    %152 = arith.mulf %151, %150 : vector<2x16xf32>
    %153 = math.tanh %152 : vector<2x16xf32>
    %cst_59 = arith.constant 5.000000e-01 : f32
    %154 = vector.broadcast %cst_59 : f32 to vector<2x16xf32>
    %155 = arith.mulf %154, %153 : vector<2x16xf32>
    %cst_60 = arith.constant 5.000000e-01 : f32
    %156 = vector.broadcast %cst_60 : f32 to vector<2x16xf32>
    %157 = arith.addf %155, %156 : vector<2x16xf32>
    %158 = arith.mulf %147, %83 : vector<2x16xf32>
    %159 = arith.mulf %139, %149 : vector<2x16xf32>
    %160 = arith.addf %158, %159 : vector<2x16xf32>
    %161 = math.tanh %160 : vector<2x16xf32>
    %162 = arith.mulf %157, %161 : vector<2x16xf32>
    %c2_i32 = arith.constant 2 : i32
    %163 = arith.index_cast %c2_i32 : i32 to index
    %c0_61 = arith.constant 0 : index
    %c0_62 = arith.constant 0 : index
    %164 = vector.load %arg1[%163, %c0_61, %c0_62] : memref<8x2x64xbf16, #tpu.memory_space<vmem>>, vector<1x2x64xbf16>
    %165 = vector.shape_cast %164 : vector<1x2x64xbf16> to vector<2x64xbf16>
    %166 = arith.extf %165 : vector<2x64xbf16> to vector<2x64xf32>
    %167 = arith.truncf %123 : vector<2x16xf32> to vector<2x16xbf16>
    %cst_63 = arith.constant dense<0.000000e+00> : vector<2x64xf32>
    %168 = tpu.matmul %167, %3, %cst_63 {dimension_numbers = #tpu.dot_dimension_numbers<[1], [0], [0], [1], [0, 0, 1, 1], [], []>} : vector<2x16xbf16>, vector<16x64xbf16>, vector<2x64xf32> -> vector<2x64xf32>
    %169 = arith.addf %166, %168 : vector<2x64xf32>
    %170 = vector.extract_strided_slice %169 {offsets = [0, 0], sizes = [2, 16], strides = [1, 1]} : vector<2x64xf32> to vector<2x16xf32>
    %cst_64 = arith.constant 5.000000e-01 : f32
    %171 = vector.broadcast %cst_64 : f32 to vector<2x16xf32>
    %172 = arith.mulf %171, %170 : vector<2x16xf32>
    %173 = math.tanh %172 : vector<2x16xf32>
    %cst_65 = arith.constant 5.000000e-01 : f32
    %174 = vector.broadcast %cst_65 : f32 to vector<2x16xf32>
    %175 = arith.mulf %174, %173 : vector<2x16xf32>
    %cst_66 = arith.constant 5.000000e-01 : f32
    %176 = vector.broadcast %cst_66 : f32 to vector<2x16xf32>
    %177 = arith.addf %175, %176 : vector<2x16xf32>
    %178 = vector.extract_strided_slice %169 {offsets = [0, 16], sizes = [2, 16], strides = [1, 1]} : vector<2x64xf32> to vector<2x16xf32>
    %cst_67 = arith.constant 5.000000e-01 : f32
    %179 = vector.broadcast %cst_67 : f32 to vector<2x16xf32>
    %180 = arith.mulf %179, %178 : vector<2x16xf32>
    %181 = math.tanh %180 : vector<2x16xf32>
    %cst_68 = arith.constant 5.000000e-01 : f32
    %182 = vector.broadcast %cst_68 : f32 to vector<2x16xf32>
    %183 = arith.mulf %182, %181 : vector<2x16xf32>
    %cst_69 = arith.constant 5.000000e-01 : f32
    %184 = vector.broadcast %cst_69 : f32 to vector<2x16xf32>
    %185 = arith.addf %183, %184 : vector<2x16xf32>
    %186 = vector.extract_strided_slice %169 {offsets = [0, 32], sizes = [2, 16], strides = [1, 1]} : vector<2x64xf32> to vector<2x16xf32>
    %187 = math.tanh %186 : vector<2x16xf32>
    %188 = vector.extract_strided_slice %169 {offsets = [0, 48], sizes = [2, 16], strides = [1, 1]} : vector<2x64xf32> to vector<2x16xf32>
    %cst_70 = arith.constant 5.000000e-01 : f32
    %189 = vector.broadcast %cst_70 : f32 to vector<2x16xf32>
    %190 = arith.mulf %189, %188 : vector<2x16xf32>
    %191 = math.tanh %190 : vector<2x16xf32>
    %cst_71 = arith.constant 5.000000e-01 : f32
    %192 = vector.broadcast %cst_71 : f32 to vector<2x16xf32>
    %193 = arith.mulf %192, %191 : vector<2x16xf32>
    %cst_72 = arith.constant 5.000000e-01 : f32
    %194 = vector.broadcast %cst_72 : f32 to vector<2x16xf32>
    %195 = arith.addf %193, %194 : vector<2x16xf32>
    %196 = arith.mulf %185, %121 : vector<2x16xf32>
    %197 = arith.mulf %177, %187 : vector<2x16xf32>
    %198 = arith.addf %196, %197 : vector<2x16xf32>
    %199 = math.tanh %198 : vector<2x16xf32>
    %200 = arith.mulf %195, %199 : vector<2x16xf32>
    %c7_i32_73 = arith.constant 7 : i32
    %201 = arith.subi %c7_i32_73, %c2_i32 : i32
    %202 = arith.index_cast %201 : i32 to index
    %c0_74 = arith.constant 0 : index
    %c0_75 = arith.constant 0 : index
    %203 = vector.load %arg2[%202, %c0_74, %c0_75] : memref<8x2x64xbf16, #tpu.memory_space<vmem>>, vector<1x2x64xbf16>
    %204 = vector.shape_cast %203 : vector<1x2x64xbf16> to vector<2x64xbf16>
    %205 = arith.extf %204 : vector<2x64xbf16> to vector<2x64xf32>
    %206 = arith.truncf %162 : vector<2x16xf32> to vector<2x16xbf16>
    %cst_76 = arith.constant dense<0.000000e+00> : vector<2x64xf32>
    %207 = tpu.matmul %206, %4, %cst_76 {dimension_numbers = #tpu.dot_dimension_numbers<[1], [0], [0], [1], [0, 0, 1, 1], [], []>} : vector<2x16xbf16>, vector<16x64xbf16>, vector<2x64xf32> -> vector<2x64xf32>
    %208 = arith.addf %205, %207 : vector<2x64xf32>
    %209 = vector.extract_strided_slice %208 {offsets = [0, 0], sizes = [2, 16], strides = [1, 1]} : vector<2x64xf32> to vector<2x16xf32>
    %cst_77 = arith.constant 5.000000e-01 : f32
    %210 = vector.broadcast %cst_77 : f32 to vector<2x16xf32>
    %211 = arith.mulf %210, %209 : vector<2x16xf32>
    %212 = math.tanh %211 : vector<2x16xf32>
    %cst_78 = arith.constant 5.000000e-01 : f32
    %213 = vector.broadcast %cst_78 : f32 to vector<2x16xf32>
    %214 = arith.mulf %213, %212 : vector<2x16xf32>
    %cst_79 = arith.constant 5.000000e-01 : f32
    %215 = vector.broadcast %cst_79 : f32 to vector<2x16xf32>
    %216 = arith.addf %214, %215 : vector<2x16xf32>
    %217 = vector.extract_strided_slice %208 {offsets = [0, 16], sizes = [2, 16], strides = [1, 1]} : vector<2x64xf32> to vector<2x16xf32>
    %cst_80 = arith.constant 5.000000e-01 : f32
    %218 = vector.broadcast %cst_80 : f32 to vector<2x16xf32>
    %219 = arith.mulf %218, %217 : vector<2x16xf32>
    %220 = math.tanh %219 : vector<2x16xf32>
    %cst_81 = arith.constant 5.000000e-01 : f32
    %221 = vector.broadcast %cst_81 : f32 to vector<2x16xf32>
    %222 = arith.mulf %221, %220 : vector<2x16xf32>
    %cst_82 = arith.constant 5.000000e-01 : f32
    %223 = vector.broadcast %cst_82 : f32 to vector<2x16xf32>
    %224 = arith.addf %222, %223 : vector<2x16xf32>
    %225 = vector.extract_strided_slice %208 {offsets = [0, 32], sizes = [2, 16], strides = [1, 1]} : vector<2x64xf32> to vector<2x16xf32>
    %226 = math.tanh %225 : vector<2x16xf32>
    %227 = vector.extract_strided_slice %208 {offsets = [0, 48], sizes = [2, 16], strides = [1, 1]} : vector<2x64xf32> to vector<2x16xf32>
    %cst_83 = arith.constant 5.000000e-01 : f32
    %228 = vector.broadcast %cst_83 : f32 to vector<2x16xf32>
    %229 = arith.mulf %228, %227 : vector<2x16xf32>
    %230 = math.tanh %229 : vector<2x16xf32>
    %cst_84 = arith.constant 5.000000e-01 : f32
    %231 = vector.broadcast %cst_84 : f32 to vector<2x16xf32>
    %232 = arith.mulf %231, %230 : vector<2x16xf32>
    %cst_85 = arith.constant 5.000000e-01 : f32
    %233 = vector.broadcast %cst_85 : f32 to vector<2x16xf32>
    %234 = arith.addf %232, %233 : vector<2x16xf32>
    %235 = arith.mulf %224, %160 : vector<2x16xf32>
    %236 = arith.mulf %216, %226 : vector<2x16xf32>
    %237 = arith.addf %235, %236 : vector<2x16xf32>
    %238 = math.tanh %237 : vector<2x16xf32>
    %239 = arith.mulf %234, %238 : vector<2x16xf32>
    %c3_i32 = arith.constant 3 : i32
    %240 = arith.index_cast %c3_i32 : i32 to index
    %c0_86 = arith.constant 0 : index
    %c0_87 = arith.constant 0 : index
    %241 = vector.load %arg1[%240, %c0_86, %c0_87] : memref<8x2x64xbf16, #tpu.memory_space<vmem>>, vector<1x2x64xbf16>
    %242 = vector.shape_cast %241 : vector<1x2x64xbf16> to vector<2x64xbf16>
    %243 = arith.extf %242 : vector<2x64xbf16> to vector<2x64xf32>
    %244 = arith.truncf %200 : vector<2x16xf32> to vector<2x16xbf16>
    %cst_88 = arith.constant dense<0.000000e+00> : vector<2x64xf32>
    %245 = tpu.matmul %244, %3, %cst_88 {dimension_numbers = #tpu.dot_dimension_numbers<[1], [0], [0], [1], [0, 0, 1, 1], [], []>} : vector<2x16xbf16>, vector<16x64xbf16>, vector<2x64xf32> -> vector<2x64xf32>
    %246 = arith.addf %243, %245 : vector<2x64xf32>
    %247 = vector.extract_strided_slice %246 {offsets = [0, 0], sizes = [2, 16], strides = [1, 1]} : vector<2x64xf32> to vector<2x16xf32>
    %cst_89 = arith.constant 5.000000e-01 : f32
    %248 = vector.broadcast %cst_89 : f32 to vector<2x16xf32>
    %249 = arith.mulf %248, %247 : vector<2x16xf32>
    %250 = math.tanh %249 : vector<2x16xf32>
    %cst_90 = arith.constant 5.000000e-01 : f32
    %251 = vector.broadcast %cst_90 : f32 to vector<2x16xf32>
    %252 = arith.mulf %251, %250 : vector<2x16xf32>
    %cst_91 = arith.constant 5.000000e-01 : f32
    %253 = vector.broadcast %cst_91 : f32 to vector<2x16xf32>
    %254 = arith.addf %252, %253 : vector<2x16xf32>
    %255 = vector.extract_strided_slice %246 {offsets = [0, 16], sizes = [2, 16], strides = [1, 1]} : vector<2x64xf32> to vector<2x16xf32>
    %cst_92 = arith.constant 5.000000e-01 : f32
    %256 = vector.broadcast %cst_92 : f32 to vector<2x16xf32>
    %257 = arith.mulf %256, %255 : vector<2x16xf32>
    %258 = math.tanh %257 : vector<2x16xf32>
    %cst_93 = arith.constant 5.000000e-01 : f32
    %259 = vector.broadcast %cst_93 : f32 to vector<2x16xf32>
    %260 = arith.mulf %259, %258 : vector<2x16xf32>
    %cst_94 = arith.constant 5.000000e-01 : f32
    %261 = vector.broadcast %cst_94 : f32 to vector<2x16xf32>
    %262 = arith.addf %260, %261 : vector<2x16xf32>
    %263 = vector.extract_strided_slice %246 {offsets = [0, 32], sizes = [2, 16], strides = [1, 1]} : vector<2x64xf32> to vector<2x16xf32>
    %264 = math.tanh %263 : vector<2x16xf32>
    %265 = vector.extract_strided_slice %246 {offsets = [0, 48], sizes = [2, 16], strides = [1, 1]} : vector<2x64xf32> to vector<2x16xf32>
    %cst_95 = arith.constant 5.000000e-01 : f32
    %266 = vector.broadcast %cst_95 : f32 to vector<2x16xf32>
    %267 = arith.mulf %266, %265 : vector<2x16xf32>
    %268 = math.tanh %267 : vector<2x16xf32>
    %cst_96 = arith.constant 5.000000e-01 : f32
    %269 = vector.broadcast %cst_96 : f32 to vector<2x16xf32>
    %270 = arith.mulf %269, %268 : vector<2x16xf32>
    %cst_97 = arith.constant 5.000000e-01 : f32
    %271 = vector.broadcast %cst_97 : f32 to vector<2x16xf32>
    %272 = arith.addf %270, %271 : vector<2x16xf32>
    %273 = arith.mulf %262, %198 : vector<2x16xf32>
    %274 = arith.mulf %254, %264 : vector<2x16xf32>
    %275 = arith.addf %273, %274 : vector<2x16xf32>
    %276 = math.tanh %275 : vector<2x16xf32>
    %277 = arith.mulf %272, %276 : vector<2x16xf32>
    %c7_i32_98 = arith.constant 7 : i32
    %278 = arith.subi %c7_i32_98, %c3_i32 : i32
    %279 = arith.index_cast %278 : i32 to index
    %c0_99 = arith.constant 0 : index
    %c0_100 = arith.constant 0 : index
    %280 = vector.load %arg2[%279, %c0_99, %c0_100] : memref<8x2x64xbf16, #tpu.memory_space<vmem>>, vector<1x2x64xbf16>
    %281 = vector.shape_cast %280 : vector<1x2x64xbf16> to vector<2x64xbf16>
    %282 = arith.extf %281 : vector<2x64xbf16> to vector<2x64xf32>
    %283 = arith.truncf %239 : vector<2x16xf32> to vector<2x16xbf16>
    %cst_101 = arith.constant dense<0.000000e+00> : vector<2x64xf32>
    %284 = tpu.matmul %283, %4, %cst_101 {dimension_numbers = #tpu.dot_dimension_numbers<[1], [0], [0], [1], [0, 0, 1, 1], [], []>} : vector<2x16xbf16>, vector<16x64xbf16>, vector<2x64xf32> -> vector<2x64xf32>
    %285 = arith.addf %282, %284 : vector<2x64xf32>
    %286 = vector.extract_strided_slice %285 {offsets = [0, 0], sizes = [2, 16], strides = [1, 1]} : vector<2x64xf32> to vector<2x16xf32>
    %cst_102 = arith.constant 5.000000e-01 : f32
    %287 = vector.broadcast %cst_102 : f32 to vector<2x16xf32>
    %288 = arith.mulf %287, %286 : vector<2x16xf32>
    %289 = math.tanh %288 : vector<2x16xf32>
    %cst_103 = arith.constant 5.000000e-01 : f32
    %290 = vector.broadcast %cst_103 : f32 to vector<2x16xf32>
    %291 = arith.mulf %290, %289 : vector<2x16xf32>
    %cst_104 = arith.constant 5.000000e-01 : f32
    %292 = vector.broadcast %cst_104 : f32 to vector<2x16xf32>
    %293 = arith.addf %291, %292 : vector<2x16xf32>
    %294 = vector.extract_strided_slice %285 {offsets = [0, 16], sizes = [2, 16], strides = [1, 1]} : vector<2x64xf32> to vector<2x16xf32>
    %cst_105 = arith.constant 5.000000e-01 : f32
    %295 = vector.broadcast %cst_105 : f32 to vector<2x16xf32>
    %296 = arith.mulf %295, %294 : vector<2x16xf32>
    %297 = math.tanh %296 : vector<2x16xf32>
    %cst_106 = arith.constant 5.000000e-01 : f32
    %298 = vector.broadcast %cst_106 : f32 to vector<2x16xf32>
    %299 = arith.mulf %298, %297 : vector<2x16xf32>
    %cst_107 = arith.constant 5.000000e-01 : f32
    %300 = vector.broadcast %cst_107 : f32 to vector<2x16xf32>
    %301 = arith.addf %299, %300 : vector<2x16xf32>
    %302 = vector.extract_strided_slice %285 {offsets = [0, 32], sizes = [2, 16], strides = [1, 1]} : vector<2x64xf32> to vector<2x16xf32>
    %303 = math.tanh %302 : vector<2x16xf32>
    %304 = vector.extract_strided_slice %285 {offsets = [0, 48], sizes = [2, 16], strides = [1, 1]} : vector<2x64xf32> to vector<2x16xf32>
    %cst_108 = arith.constant 5.000000e-01 : f32
    %305 = vector.broadcast %cst_108 : f32 to vector<2x16xf32>
    %306 = arith.mulf %305, %304 : vector<2x16xf32>
    %307 = math.tanh %306 : vector<2x16xf32>
    %cst_109 = arith.constant 5.000000e-01 : f32
    %308 = vector.broadcast %cst_109 : f32 to vector<2x16xf32>
    %309 = arith.mulf %308, %307 : vector<2x16xf32>
    %cst_110 = arith.constant 5.000000e-01 : f32
    %310 = vector.broadcast %cst_110 : f32 to vector<2x16xf32>
    %311 = arith.addf %309, %310 : vector<2x16xf32>
    %312 = arith.mulf %301, %237 : vector<2x16xf32>
    %313 = arith.mulf %293, %303 : vector<2x16xf32>
    %314 = arith.addf %312, %313 : vector<2x16xf32>
    %315 = math.tanh %314 : vector<2x16xf32>
    %316 = arith.mulf %311, %315 : vector<2x16xf32>
    %c4_i32 = arith.constant 4 : i32
    %317 = arith.index_cast %c4_i32 : i32 to index
    %c0_111 = arith.constant 0 : index
    %c0_112 = arith.constant 0 : index
    %318 = vector.load %arg1[%317, %c0_111, %c0_112] : memref<8x2x64xbf16, #tpu.memory_space<vmem>>, vector<1x2x64xbf16>
    %319 = vector.shape_cast %318 : vector<1x2x64xbf16> to vector<2x64xbf16>
    %320 = arith.extf %319 : vector<2x64xbf16> to vector<2x64xf32>
    %321 = arith.truncf %277 : vector<2x16xf32> to vector<2x16xbf16>
    %cst_113 = arith.constant dense<0.000000e+00> : vector<2x64xf32>
    %322 = tpu.matmul %321, %3, %cst_113 {dimension_numbers = #tpu.dot_dimension_numbers<[1], [0], [0], [1], [0, 0, 1, 1], [], []>} : vector<2x16xbf16>, vector<16x64xbf16>, vector<2x64xf32> -> vector<2x64xf32>
    %323 = arith.addf %320, %322 : vector<2x64xf32>
    %324 = vector.extract_strided_slice %323 {offsets = [0, 0], sizes = [2, 16], strides = [1, 1]} : vector<2x64xf32> to vector<2x16xf32>
    %cst_114 = arith.constant 5.000000e-01 : f32
    %325 = vector.broadcast %cst_114 : f32 to vector<2x16xf32>
    %326 = arith.mulf %325, %324 : vector<2x16xf32>
    %327 = math.tanh %326 : vector<2x16xf32>
    %cst_115 = arith.constant 5.000000e-01 : f32
    %328 = vector.broadcast %cst_115 : f32 to vector<2x16xf32>
    %329 = arith.mulf %328, %327 : vector<2x16xf32>
    %cst_116 = arith.constant 5.000000e-01 : f32
    %330 = vector.broadcast %cst_116 : f32 to vector<2x16xf32>
    %331 = arith.addf %329, %330 : vector<2x16xf32>
    %332 = vector.extract_strided_slice %323 {offsets = [0, 16], sizes = [2, 16], strides = [1, 1]} : vector<2x64xf32> to vector<2x16xf32>
    %cst_117 = arith.constant 5.000000e-01 : f32
    %333 = vector.broadcast %cst_117 : f32 to vector<2x16xf32>
    %334 = arith.mulf %333, %332 : vector<2x16xf32>
    %335 = math.tanh %334 : vector<2x16xf32>
    %cst_118 = arith.constant 5.000000e-01 : f32
    %336 = vector.broadcast %cst_118 : f32 to vector<2x16xf32>
    %337 = arith.mulf %336, %335 : vector<2x16xf32>
    %cst_119 = arith.constant 5.000000e-01 : f32
    %338 = vector.broadcast %cst_119 : f32 to vector<2x16xf32>
    %339 = arith.addf %337, %338 : vector<2x16xf32>
    %340 = vector.extract_strided_slice %323 {offsets = [0, 32], sizes = [2, 16], strides = [1, 1]} : vector<2x64xf32> to vector<2x16xf32>
    %341 = math.tanh %340 : vector<2x16xf32>
    %342 = vector.extract_strided_slice %323 {offsets = [0, 48], sizes = [2, 16], strides = [1, 1]} : vector<2x64xf32> to vector<2x16xf32>
    %cst_120 = arith.constant 5.000000e-01 : f32
    %343 = vector.broadcast %cst_120 : f32 to vector<2x16xf32>
    %344 = arith.mulf %343, %342 : vector<2x16xf32>
    %345 = math.tanh %344 : vector<2x16xf32>
    %cst_121 = arith.constant 5.000000e-01 : f32
    %346 = vector.broadcast %cst_121 : f32 to vector<2x16xf32>
    %347 = arith.mulf %346, %345 : vector<2x16xf32>
    %cst_122 = arith.constant 5.000000e-01 : f32
    %348 = vector.broadcast %cst_122 : f32 to vector<2x16xf32>
    %349 = arith.addf %347, %348 : vector<2x16xf32>
    %350 = arith.mulf %339, %275 : vector<2x16xf32>
    %351 = arith.mulf %331, %341 : vector<2x16xf32>
    %352 = arith.addf %350, %351 : vector<2x16xf32>
    %353 = math.tanh %352 : vector<2x16xf32>
    %354 = arith.mulf %349, %353 : vector<2x16xf32>
    %c7_i32_123 = arith.constant 7 : i32
    %355 = arith.subi %c7_i32_123, %c4_i32 : i32
    %356 = arith.index_cast %355 : i32 to index
    %c0_124 = arith.constant 0 : index
    %c0_125 = arith.constant 0 : index
    %357 = vector.load %arg2[%356, %c0_124, %c0_125] : memref<8x2x64xbf16, #tpu.memory_space<vmem>>, vector<1x2x64xbf16>
    %358 = vector.shape_cast %357 : vector<1x2x64xbf16> to vector<2x64xbf16>
    %359 = arith.extf %358 : vector<2x64xbf16> to vector<2x64xf32>
    %360 = arith.truncf %316 : vector<2x16xf32> to vector<2x16xbf16>
    %cst_126 = arith.constant dense<0.000000e+00> : vector<2x64xf32>
    %361 = tpu.matmul %360, %4, %cst_126 {dimension_numbers = #tpu.dot_dimension_numbers<[1], [0], [0], [1], [0, 0, 1, 1], [], []>} : vector<2x16xbf16>, vector<16x64xbf16>, vector<2x64xf32> -> vector<2x64xf32>
    %362 = arith.addf %359, %361 : vector<2x64xf32>
    %363 = vector.extract_strided_slice %362 {offsets = [0, 0], sizes = [2, 16], strides = [1, 1]} : vector<2x64xf32> to vector<2x16xf32>
    %cst_127 = arith.constant 5.000000e-01 : f32
    %364 = vector.broadcast %cst_127 : f32 to vector<2x16xf32>
    %365 = arith.mulf %364, %363 : vector<2x16xf32>
    %366 = math.tanh %365 : vector<2x16xf32>
    %cst_128 = arith.constant 5.000000e-01 : f32
    %367 = vector.broadcast %cst_128 : f32 to vector<2x16xf32>
    %368 = arith.mulf %367, %366 : vector<2x16xf32>
    %cst_129 = arith.constant 5.000000e-01 : f32
    %369 = vector.broadcast %cst_129 : f32 to vector<2x16xf32>
    %370 = arith.addf %368, %369 : vector<2x16xf32>
    %371 = vector.extract_strided_slice %362 {offsets = [0, 16], sizes = [2, 16], strides = [1, 1]} : vector<2x64xf32> to vector<2x16xf32>
    %cst_130 = arith.constant 5.000000e-01 : f32
    %372 = vector.broadcast %cst_130 : f32 to vector<2x16xf32>
    %373 = arith.mulf %372, %371 : vector<2x16xf32>
    %374 = math.tanh %373 : vector<2x16xf32>
    %cst_131 = arith.constant 5.000000e-01 : f32
    %375 = vector.broadcast %cst_131 : f32 to vector<2x16xf32>
    %376 = arith.mulf %375, %374 : vector<2x16xf32>
    %cst_132 = arith.constant 5.000000e-01 : f32
    %377 = vector.broadcast %cst_132 : f32 to vector<2x16xf32>
    %378 = arith.addf %376, %377 : vector<2x16xf32>
    %379 = vector.extract_strided_slice %362 {offsets = [0, 32], sizes = [2, 16], strides = [1, 1]} : vector<2x64xf32> to vector<2x16xf32>
    %380 = math.tanh %379 : vector<2x16xf32>
    %381 = vector.extract_strided_slice %362 {offsets = [0, 48], sizes = [2, 16], strides = [1, 1]} : vector<2x64xf32> to vector<2x16xf32>
    %cst_133 = arith.constant 5.000000e-01 : f32
    %382 = vector.broadcast %cst_133 : f32 to vector<2x16xf32>
    %383 = arith.mulf %382, %381 : vector<2x16xf32>
    %384 = math.tanh %383 : vector<2x16xf32>
    %cst_134 = arith.constant 5.000000e-01 : f32
    %385 = vector.broadcast %cst_134 : f32 to vector<2x16xf32>
    %386 = arith.mulf %385, %384 : vector<2x16xf32>
    %cst_135 = arith.constant 5.000000e-01 : f32
    %387 = vector.broadcast %cst_135 : f32 to vector<2x16xf32>
    %388 = arith.addf %386, %387 : vector<2x16xf32>
    %389 = arith.mulf %378, %314 : vector<2x16xf32>
    %390 = arith.mulf %370, %380 : vector<2x16xf32>
    %391 = arith.addf %389, %390 : vector<2x16xf32>
    %392 = math.tanh %391 : vector<2x16xf32>
    %393 = arith.mulf %388, %392 : vector<2x16xf32>
    %c5_i32 = arith.constant 5 : i32
    %394 = arith.index_cast %c5_i32 : i32 to index
    %c0_136 = arith.constant 0 : index
    %c0_137 = arith.constant 0 : index
    %395 = vector.load %arg1[%394, %c0_136, %c0_137] : memref<8x2x64xbf16, #tpu.memory_space<vmem>>, vector<1x2x64xbf16>
    %396 = vector.shape_cast %395 : vector<1x2x64xbf16> to vector<2x64xbf16>
    %397 = arith.extf %396 : vector<2x64xbf16> to vector<2x64xf32>
    %398 = arith.truncf %354 : vector<2x16xf32> to vector<2x16xbf16>
    %cst_138 = arith.constant dense<0.000000e+00> : vector<2x64xf32>
    %399 = tpu.matmul %398, %3, %cst_138 {dimension_numbers = #tpu.dot_dimension_numbers<[1], [0], [0], [1], [0, 0, 1, 1], [], []>} : vector<2x16xbf16>, vector<16x64xbf16>, vector<2x64xf32> -> vector<2x64xf32>
    %400 = arith.addf %397, %399 : vector<2x64xf32>
    %401 = vector.extract_strided_slice %400 {offsets = [0, 0], sizes = [2, 16], strides = [1, 1]} : vector<2x64xf32> to vector<2x16xf32>
    %cst_139 = arith.constant 5.000000e-01 : f32
    %402 = vector.broadcast %cst_139 : f32 to vector<2x16xf32>
    %403 = arith.mulf %402, %401 : vector<2x16xf32>
    %404 = math.tanh %403 : vector<2x16xf32>
    %cst_140 = arith.constant 5.000000e-01 : f32
    %405 = vector.broadcast %cst_140 : f32 to vector<2x16xf32>
    %406 = arith.mulf %405, %404 : vector<2x16xf32>
    %cst_141 = arith.constant 5.000000e-01 : f32
    %407 = vector.broadcast %cst_141 : f32 to vector<2x16xf32>
    %408 = arith.addf %406, %407 : vector<2x16xf32>
    %409 = vector.extract_strided_slice %400 {offsets = [0, 16], sizes = [2, 16], strides = [1, 1]} : vector<2x64xf32> to vector<2x16xf32>
    %cst_142 = arith.constant 5.000000e-01 : f32
    %410 = vector.broadcast %cst_142 : f32 to vector<2x16xf32>
    %411 = arith.mulf %410, %409 : vector<2x16xf32>
    %412 = math.tanh %411 : vector<2x16xf32>
    %cst_143 = arith.constant 5.000000e-01 : f32
    %413 = vector.broadcast %cst_143 : f32 to vector<2x16xf32>
    %414 = arith.mulf %413, %412 : vector<2x16xf32>
    %cst_144 = arith.constant 5.000000e-01 : f32
    %415 = vector.broadcast %cst_144 : f32 to vector<2x16xf32>
    %416 = arith.addf %414, %415 : vector<2x16xf32>
    %417 = vector.extract_strided_slice %400 {offsets = [0, 32], sizes = [2, 16], strides = [1, 1]} : vector<2x64xf32> to vector<2x16xf32>
    %418 = math.tanh %417 : vector<2x16xf32>
    %419 = vector.extract_strided_slice %400 {offsets = [0, 48], sizes = [2, 16], strides = [1, 1]} : vector<2x64xf32> to vector<2x16xf32>
    %cst_145 = arith.constant 5.000000e-01 : f32
    %420 = vector.broadcast %cst_145 : f32 to vector<2x16xf32>
    %421 = arith.mulf %420, %419 : vector<2x16xf32>
    %422 = math.tanh %421 : vector<2x16xf32>
    %cst_146 = arith.constant 5.000000e-01 : f32
    %423 = vector.broadcast %cst_146 : f32 to vector<2x16xf32>
    %424 = arith.mulf %423, %422 : vector<2x16xf32>
    %cst_147 = arith.constant 5.000000e-01 : f32
    %425 = vector.broadcast %cst_147 : f32 to vector<2x16xf32>
    %426 = arith.addf %424, %425 : vector<2x16xf32>
    %427 = arith.mulf %416, %352 : vector<2x16xf32>
    %428 = arith.mulf %408, %418 : vector<2x16xf32>
    %429 = arith.addf %427, %428 : vector<2x16xf32>
    %430 = math.tanh %429 : vector<2x16xf32>
    %431 = arith.mulf %426, %430 : vector<2x16xf32>
    %c7_i32_148 = arith.constant 7 : i32
    %432 = arith.subi %c7_i32_148, %c5_i32 : i32
    %433 = arith.index_cast %432 : i32 to index
    %c0_149 = arith.constant 0 : index
    %c0_150 = arith.constant 0 : index
    %434 = vector.load %arg2[%433, %c0_149, %c0_150] : memref<8x2x64xbf16, #tpu.memory_space<vmem>>, vector<1x2x64xbf16>
    %435 = vector.shape_cast %434 : vector<1x2x64xbf16> to vector<2x64xbf16>
    %436 = arith.extf %435 : vector<2x64xbf16> to vector<2x64xf32>
    %437 = arith.truncf %393 : vector<2x16xf32> to vector<2x16xbf16>
    %cst_151 = arith.constant dense<0.000000e+00> : vector<2x64xf32>
    %438 = tpu.matmul %437, %4, %cst_151 {dimension_numbers = #tpu.dot_dimension_numbers<[1], [0], [0], [1], [0, 0, 1, 1], [], []>} : vector<2x16xbf16>, vector<16x64xbf16>, vector<2x64xf32> -> vector<2x64xf32>
    %439 = arith.addf %436, %438 : vector<2x64xf32>
    %440 = vector.extract_strided_slice %439 {offsets = [0, 0], sizes = [2, 16], strides = [1, 1]} : vector<2x64xf32> to vector<2x16xf32>
    %cst_152 = arith.constant 5.000000e-01 : f32
    %441 = vector.broadcast %cst_152 : f32 to vector<2x16xf32>
    %442 = arith.mulf %441, %440 : vector<2x16xf32>
    %443 = math.tanh %442 : vector<2x16xf32>
    %cst_153 = arith.constant 5.000000e-01 : f32
    %444 = vector.broadcast %cst_153 : f32 to vector<2x16xf32>
    %445 = arith.mulf %444, %443 : vector<2x16xf32>
    %cst_154 = arith.constant 5.000000e-01 : f32
    %446 = vector.broadcast %cst_154 : f32 to vector<2x16xf32>
    %447 = arith.addf %445, %446 : vector<2x16xf32>
    %448 = vector.extract_strided_slice %439 {offsets = [0, 16], sizes = [2, 16], strides = [1, 1]} : vector<2x64xf32> to vector<2x16xf32>
    %cst_155 = arith.constant 5.000000e-01 : f32
    %449 = vector.broadcast %cst_155 : f32 to vector<2x16xf32>
    %450 = arith.mulf %449, %448 : vector<2x16xf32>
    %451 = math.tanh %450 : vector<2x16xf32>
    %cst_156 = arith.constant 5.000000e-01 : f32
    %452 = vector.broadcast %cst_156 : f32 to vector<2x16xf32>
    %453 = arith.mulf %452, %451 : vector<2x16xf32>
    %cst_157 = arith.constant 5.000000e-01 : f32
    %454 = vector.broadcast %cst_157 : f32 to vector<2x16xf32>
    %455 = arith.addf %453, %454 : vector<2x16xf32>
    %456 = vector.extract_strided_slice %439 {offsets = [0, 32], sizes = [2, 16], strides = [1, 1]} : vector<2x64xf32> to vector<2x16xf32>
    %457 = math.tanh %456 : vector<2x16xf32>
    %458 = vector.extract_strided_slice %439 {offsets = [0, 48], sizes = [2, 16], strides = [1, 1]} : vector<2x64xf32> to vector<2x16xf32>
    %cst_158 = arith.constant 5.000000e-01 : f32
    %459 = vector.broadcast %cst_158 : f32 to vector<2x16xf32>
    %460 = arith.mulf %459, %458 : vector<2x16xf32>
    %461 = math.tanh %460 : vector<2x16xf32>
    %cst_159 = arith.constant 5.000000e-01 : f32
    %462 = vector.broadcast %cst_159 : f32 to vector<2x16xf32>
    %463 = arith.mulf %462, %461 : vector<2x16xf32>
    %cst_160 = arith.constant 5.000000e-01 : f32
    %464 = vector.broadcast %cst_160 : f32 to vector<2x16xf32>
    %465 = arith.addf %463, %464 : vector<2x16xf32>
    %466 = arith.mulf %455, %391 : vector<2x16xf32>
    %467 = arith.mulf %447, %457 : vector<2x16xf32>
    %468 = arith.addf %466, %467 : vector<2x16xf32>
    %469 = math.tanh %468 : vector<2x16xf32>
    %470 = arith.mulf %465, %469 : vector<2x16xf32>
    %c6_i32 = arith.constant 6 : i32
    %471 = arith.index_cast %c6_i32 : i32 to index
    %c0_161 = arith.constant 0 : index
    %c0_162 = arith.constant 0 : index
    %472 = vector.load %arg1[%471, %c0_161, %c0_162] : memref<8x2x64xbf16, #tpu.memory_space<vmem>>, vector<1x2x64xbf16>
    %473 = vector.shape_cast %472 : vector<1x2x64xbf16> to vector<2x64xbf16>
    %474 = arith.extf %473 : vector<2x64xbf16> to vector<2x64xf32>
    %475 = arith.truncf %431 : vector<2x16xf32> to vector<2x16xbf16>
    %cst_163 = arith.constant dense<0.000000e+00> : vector<2x64xf32>
    %476 = tpu.matmul %475, %3, %cst_163 {dimension_numbers = #tpu.dot_dimension_numbers<[1], [0], [0], [1], [0, 0, 1, 1], [], []>} : vector<2x16xbf16>, vector<16x64xbf16>, vector<2x64xf32> -> vector<2x64xf32>
    %477 = arith.addf %474, %476 : vector<2x64xf32>
    %478 = vector.extract_strided_slice %477 {offsets = [0, 0], sizes = [2, 16], strides = [1, 1]} : vector<2x64xf32> to vector<2x16xf32>
    %cst_164 = arith.constant 5.000000e-01 : f32
    %479 = vector.broadcast %cst_164 : f32 to vector<2x16xf32>
    %480 = arith.mulf %479, %478 : vector<2x16xf32>
    %481 = math.tanh %480 : vector<2x16xf32>
    %cst_165 = arith.constant 5.000000e-01 : f32
    %482 = vector.broadcast %cst_165 : f32 to vector<2x16xf32>
    %483 = arith.mulf %482, %481 : vector<2x16xf32>
    %cst_166 = arith.constant 5.000000e-01 : f32
    %484 = vector.broadcast %cst_166 : f32 to vector<2x16xf32>
    %485 = arith.addf %483, %484 : vector<2x16xf32>
    %486 = vector.extract_strided_slice %477 {offsets = [0, 16], sizes = [2, 16], strides = [1, 1]} : vector<2x64xf32> to vector<2x16xf32>
    %cst_167 = arith.constant 5.000000e-01 : f32
    %487 = vector.broadcast %cst_167 : f32 to vector<2x16xf32>
    %488 = arith.mulf %487, %486 : vector<2x16xf32>
    %489 = math.tanh %488 : vector<2x16xf32>
    %cst_168 = arith.constant 5.000000e-01 : f32
    %490 = vector.broadcast %cst_168 : f32 to vector<2x16xf32>
    %491 = arith.mulf %490, %489 : vector<2x16xf32>
    %cst_169 = arith.constant 5.000000e-01 : f32
    %492 = vector.broadcast %cst_169 : f32 to vector<2x16xf32>
    %493 = arith.addf %491, %492 : vector<2x16xf32>
    %494 = vector.extract_strided_slice %477 {offsets = [0, 32], sizes = [2, 16], strides = [1, 1]} : vector<2x64xf32> to vector<2x16xf32>
    %495 = math.tanh %494 : vector<2x16xf32>
    %496 = vector.extract_strided_slice %477 {offsets = [0, 48], sizes = [2, 16], strides = [1, 1]} : vector<2x64xf32> to vector<2x16xf32>
    %cst_170 = arith.constant 5.000000e-01 : f32
    %497 = vector.broadcast %cst_170 : f32 to vector<2x16xf32>
    %498 = arith.mulf %497, %496 : vector<2x16xf32>
    %499 = math.tanh %498 : vector<2x16xf32>
    %cst_171 = arith.constant 5.000000e-01 : f32
    %500 = vector.broadcast %cst_171 : f32 to vector<2x16xf32>
    %501 = arith.mulf %500, %499 : vector<2x16xf32>
    %cst_172 = arith.constant 5.000000e-01 : f32
    %502 = vector.broadcast %cst_172 : f32 to vector<2x16xf32>
    %503 = arith.addf %501, %502 : vector<2x16xf32>
    %504 = arith.mulf %493, %429 : vector<2x16xf32>
    %505 = arith.mulf %485, %495 : vector<2x16xf32>
    %506 = arith.addf %504, %505 : vector<2x16xf32>
    %507 = math.tanh %506 : vector<2x16xf32>
    %508 = arith.mulf %503, %507 : vector<2x16xf32>
    %c7_i32_173 = arith.constant 7 : i32
    %509 = arith.subi %c7_i32_173, %c6_i32 : i32
    %510 = arith.index_cast %509 : i32 to index
    %c0_174 = arith.constant 0 : index
    %c0_175 = arith.constant 0 : index
    %511 = vector.load %arg2[%510, %c0_174, %c0_175] : memref<8x2x64xbf16, #tpu.memory_space<vmem>>, vector<1x2x64xbf16>
    %512 = vector.shape_cast %511 : vector<1x2x64xbf16> to vector<2x64xbf16>
    %513 = arith.extf %512 : vector<2x64xbf16> to vector<2x64xf32>
    %514 = arith.truncf %470 : vector<2x16xf32> to vector<2x16xbf16>
    %cst_176 = arith.constant dense<0.000000e+00> : vector<2x64xf32>
    %515 = tpu.matmul %514, %4, %cst_176 {dimension_numbers = #tpu.dot_dimension_numbers<[1], [0], [0], [1], [0, 0, 1, 1], [], []>} : vector<2x16xbf16>, vector<16x64xbf16>, vector<2x64xf32> -> vector<2x64xf32>
    %516 = arith.addf %513, %515 : vector<2x64xf32>
    %517 = vector.extract_strided_slice %516 {offsets = [0, 0], sizes = [2, 16], strides = [1, 1]} : vector<2x64xf32> to vector<2x16xf32>
    %cst_177 = arith.constant 5.000000e-01 : f32
    %518 = vector.broadcast %cst_177 : f32 to vector<2x16xf32>
    %519 = arith.mulf %518, %517 : vector<2x16xf32>
    %520 = math.tanh %519 : vector<2x16xf32>
    %cst_178 = arith.constant 5.000000e-01 : f32
    %521 = vector.broadcast %cst_178 : f32 to vector<2x16xf32>
    %522 = arith.mulf %521, %520 : vector<2x16xf32>
    %cst_179 = arith.constant 5.000000e-01 : f32
    %523 = vector.broadcast %cst_179 : f32 to vector<2x16xf32>
    %524 = arith.addf %522, %523 : vector<2x16xf32>
    %525 = vector.extract_strided_slice %516 {offsets = [0, 16], sizes = [2, 16], strides = [1, 1]} : vector<2x64xf32> to vector<2x16xf32>
    %cst_180 = arith.constant 5.000000e-01 : f32
    %526 = vector.broadcast %cst_180 : f32 to vector<2x16xf32>
    %527 = arith.mulf %526, %525 : vector<2x16xf32>
    %528 = math.tanh %527 : vector<2x16xf32>
    %cst_181 = arith.constant 5.000000e-01 : f32
    %529 = vector.broadcast %cst_181 : f32 to vector<2x16xf32>
    %530 = arith.mulf %529, %528 : vector<2x16xf32>
    %cst_182 = arith.constant 5.000000e-01 : f32
    %531 = vector.broadcast %cst_182 : f32 to vector<2x16xf32>
    %532 = arith.addf %530, %531 : vector<2x16xf32>
    %533 = vector.extract_strided_slice %516 {offsets = [0, 32], sizes = [2, 16], strides = [1, 1]} : vector<2x64xf32> to vector<2x16xf32>
    %534 = math.tanh %533 : vector<2x16xf32>
    %535 = vector.extract_strided_slice %516 {offsets = [0, 48], sizes = [2, 16], strides = [1, 1]} : vector<2x64xf32> to vector<2x16xf32>
    %cst_183 = arith.constant 5.000000e-01 : f32
    %536 = vector.broadcast %cst_183 : f32 to vector<2x16xf32>
    %537 = arith.mulf %536, %535 : vector<2x16xf32>
    %538 = math.tanh %537 : vector<2x16xf32>
    %cst_184 = arith.constant 5.000000e-01 : f32
    %539 = vector.broadcast %cst_184 : f32 to vector<2x16xf32>
    %540 = arith.mulf %539, %538 : vector<2x16xf32>
    %cst_185 = arith.constant 5.000000e-01 : f32
    %541 = vector.broadcast %cst_185 : f32 to vector<2x16xf32>
    %542 = arith.addf %540, %541 : vector<2x16xf32>
    %543 = arith.mulf %532, %468 : vector<2x16xf32>
    %544 = arith.mulf %524, %534 : vector<2x16xf32>
    %545 = arith.addf %543, %544 : vector<2x16xf32>
    %546 = math.tanh %545 : vector<2x16xf32>
    %547 = arith.mulf %542, %546 : vector<2x16xf32>
    %c7_i32_186 = arith.constant 7 : i32
    %548 = arith.index_cast %c7_i32_186 : i32 to index
    %c0_187 = arith.constant 0 : index
    %c0_188 = arith.constant 0 : index
    %549 = vector.load %arg1[%548, %c0_187, %c0_188] : memref<8x2x64xbf16, #tpu.memory_space<vmem>>, vector<1x2x64xbf16>
    %550 = vector.shape_cast %549 : vector<1x2x64xbf16> to vector<2x64xbf16>
    %551 = arith.extf %550 : vector<2x64xbf16> to vector<2x64xf32>
    %552 = arith.truncf %508 : vector<2x16xf32> to vector<2x16xbf16>
    %cst_189 = arith.constant dense<0.000000e+00> : vector<2x64xf32>
    %553 = tpu.matmul %552, %3, %cst_189 {dimension_numbers = #tpu.dot_dimension_numbers<[1], [0], [0], [1], [0, 0, 1, 1], [], []>} : vector<2x16xbf16>, vector<16x64xbf16>, vector<2x64xf32> -> vector<2x64xf32>
    %554 = arith.addf %551, %553 : vector<2x64xf32>
    %555 = vector.extract_strided_slice %554 {offsets = [0, 0], sizes = [2, 16], strides = [1, 1]} : vector<2x64xf32> to vector<2x16xf32>
    %cst_190 = arith.constant 5.000000e-01 : f32
    %556 = vector.broadcast %cst_190 : f32 to vector<2x16xf32>
    %557 = arith.mulf %556, %555 : vector<2x16xf32>
    %558 = math.tanh %557 : vector<2x16xf32>
    %cst_191 = arith.constant 5.000000e-01 : f32
    %559 = vector.broadcast %cst_191 : f32 to vector<2x16xf32>
    %560 = arith.mulf %559, %558 : vector<2x16xf32>
    %cst_192 = arith.constant 5.000000e-01 : f32
    %561 = vector.broadcast %cst_192 : f32 to vector<2x16xf32>
    %562 = arith.addf %560, %561 : vector<2x16xf32>
    %563 = vector.extract_strided_slice %554 {offsets = [0, 16], sizes = [2, 16], strides = [1, 1]} : vector<2x64xf32> to vector<2x16xf32>
    %cst_193 = arith.constant 5.000000e-01 : f32
    %564 = vector.broadcast %cst_193 : f32 to vector<2x16xf32>
    %565 = arith.mulf %564, %563 : vector<2x16xf32>
    %566 = math.tanh %565 : vector<2x16xf32>
    %cst_194 = arith.constant 5.000000e-01 : f32
    %567 = vector.broadcast %cst_194 : f32 to vector<2x16xf32>
    %568 = arith.mulf %567, %566 : vector<2x16xf32>
    %cst_195 = arith.constant 5.000000e-01 : f32
    %569 = vector.broadcast %cst_195 : f32 to vector<2x16xf32>
    %570 = arith.addf %568, %569 : vector<2x16xf32>
    %571 = vector.extract_strided_slice %554 {offsets = [0, 32], sizes = [2, 16], strides = [1, 1]} : vector<2x64xf32> to vector<2x16xf32>
    %572 = math.tanh %571 : vector<2x16xf32>
    %573 = vector.extract_strided_slice %554 {offsets = [0, 48], sizes = [2, 16], strides = [1, 1]} : vector<2x64xf32> to vector<2x16xf32>
    %cst_196 = arith.constant 5.000000e-01 : f32
    %574 = vector.broadcast %cst_196 : f32 to vector<2x16xf32>
    %575 = arith.mulf %574, %573 : vector<2x16xf32>
    %576 = math.tanh %575 : vector<2x16xf32>
    %cst_197 = arith.constant 5.000000e-01 : f32
    %577 = vector.broadcast %cst_197 : f32 to vector<2x16xf32>
    %578 = arith.mulf %577, %576 : vector<2x16xf32>
    %cst_198 = arith.constant 5.000000e-01 : f32
    %579 = vector.broadcast %cst_198 : f32 to vector<2x16xf32>
    %580 = arith.addf %578, %579 : vector<2x16xf32>
    %581 = arith.mulf %570, %506 : vector<2x16xf32>
    %582 = arith.mulf %562, %572 : vector<2x16xf32>
    %583 = arith.addf %581, %582 : vector<2x16xf32>
    %584 = math.tanh %583 : vector<2x16xf32>
    %585 = arith.mulf %580, %584 : vector<2x16xf32>
    %c7_i32_199 = arith.constant 7 : i32
    %586 = arith.subi %c7_i32_199, %c7_i32_186 : i32
    %587 = arith.index_cast %586 : i32 to index
    %c0_200 = arith.constant 0 : index
    %c0_201 = arith.constant 0 : index
    %588 = vector.load %arg2[%587, %c0_200, %c0_201] : memref<8x2x64xbf16, #tpu.memory_space<vmem>>, vector<1x2x64xbf16>
    %589 = vector.shape_cast %588 : vector<1x2x64xbf16> to vector<2x64xbf16>
    %590 = arith.extf %589 : vector<2x64xbf16> to vector<2x64xf32>
    %591 = arith.truncf %547 : vector<2x16xf32> to vector<2x16xbf16>
    %cst_202 = arith.constant dense<0.000000e+00> : vector<2x64xf32>
    %592 = tpu.matmul %591, %4, %cst_202 {dimension_numbers = #tpu.dot_dimension_numbers<[1], [0], [0], [1], [0, 0, 1, 1], [], []>} : vector<2x16xbf16>, vector<16x64xbf16>, vector<2x64xf32> -> vector<2x64xf32>
    %593 = arith.addf %590, %592 : vector<2x64xf32>
    %594 = vector.extract_strided_slice %593 {offsets = [0, 0], sizes = [2, 16], strides = [1, 1]} : vector<2x64xf32> to vector<2x16xf32>
    %cst_203 = arith.constant 5.000000e-01 : f32
    %595 = vector.broadcast %cst_203 : f32 to vector<2x16xf32>
    %596 = arith.mulf %595, %594 : vector<2x16xf32>
    %597 = math.tanh %596 : vector<2x16xf32>
    %cst_204 = arith.constant 5.000000e-01 : f32
    %598 = vector.broadcast %cst_204 : f32 to vector<2x16xf32>
    %599 = arith.mulf %598, %597 : vector<2x16xf32>
    %cst_205 = arith.constant 5.000000e-01 : f32
    %600 = vector.broadcast %cst_205 : f32 to vector<2x16xf32>
    %601 = arith.addf %599, %600 : vector<2x16xf32>
    %602 = vector.extract_strided_slice %593 {offsets = [0, 16], sizes = [2, 16], strides = [1, 1]} : vector<2x64xf32> to vector<2x16xf32>
    %cst_206 = arith.constant 5.000000e-01 : f32
    %603 = vector.broadcast %cst_206 : f32 to vector<2x16xf32>
    %604 = arith.mulf %603, %602 : vector<2x16xf32>
    %605 = math.tanh %604 : vector<2x16xf32>
    %cst_207 = arith.constant 5.000000e-01 : f32
    %606 = vector.broadcast %cst_207 : f32 to vector<2x16xf32>
    %607 = arith.mulf %606, %605 : vector<2x16xf32>
    %cst_208 = arith.constant 5.000000e-01 : f32
    %608 = vector.broadcast %cst_208 : f32 to vector<2x16xf32>
    %609 = arith.addf %607, %608 : vector<2x16xf32>
    %610 = vector.extract_strided_slice %593 {offsets = [0, 32], sizes = [2, 16], strides = [1, 1]} : vector<2x64xf32> to vector<2x16xf32>
    %611 = math.tanh %610 : vector<2x16xf32>
    %612 = vector.extract_strided_slice %593 {offsets = [0, 48], sizes = [2, 16], strides = [1, 1]} : vector<2x64xf32> to vector<2x16xf32>
    %cst_209 = arith.constant 5.000000e-01 : f32
    %613 = vector.broadcast %cst_209 : f32 to vector<2x16xf32>
    %614 = arith.mulf %613, %612 : vector<2x16xf32>
    %615 = math.tanh %614 : vector<2x16xf32>
    %cst_210 = arith.constant 5.000000e-01 : f32
    %616 = vector.broadcast %cst_210 : f32 to vector<2x16xf32>
    %617 = arith.mulf %616, %615 : vector<2x16xf32>
    %cst_211 = arith.constant 5.000000e-01 : f32
    %618 = vector.broadcast %cst_211 : f32 to vector<2x16xf32>
    %619 = arith.addf %617, %618 : vector<2x16xf32>
    %620 = arith.mulf %609, %545 : vector<2x16xf32>
    %621 = arith.mulf %601, %611 : vector<2x16xf32>
    %622 = arith.addf %620, %621 : vector<2x16xf32>
    %623 = math.tanh %622 : vector<2x16xf32>
    %624 = arith.mulf %619, %623 : vector<2x16xf32>
    %c8_i32 = arith.constant 8 : i32
    %c0_212 = arith.constant 0 : index
    %c0_213 = arith.constant 0 : index
    %625 = vector.load %arg6[%c0_212, %c0_213] : memref<2x16xf32, #tpu.memory_space<vmem>>, vector<2x16xf32>
    tpu.vector_store %arg6[%c0_212, %c0_213], %585 {strides = array<i32>} : memref<2x16xf32, #tpu.memory_space<vmem>>, vector<2x16xf32>,
    %c0_214 = arith.constant 0 : index
    %c0_215 = arith.constant 0 : index
    %626 = vector.load %arg7[%c0_214, %c0_215] : memref<2x16xf32, #tpu.memory_space<vmem>>, vector<2x16xf32>
    tpu.vector_store %arg7[%c0_214, %c0_215], %583 {strides = array<i32>} : memref<2x16xf32, #tpu.memory_space<vmem>>, vector<2x16xf32>,
    %c0_216 = arith.constant 0 : index
    %c0_217 = arith.constant 0 : index
    %627 = vector.load %arg8[%c0_216, %c0_217] : memref<2x16xf32, #tpu.memory_space<vmem>>, vector<2x16xf32>
    tpu.vector_store %arg8[%c0_216, %c0_217], %624 {strides = array<i32>} : memref<2x16xf32, #tpu.memory_space<vmem>>, vector<2x16xf32>,
    %c0_218 = arith.constant 0 : index
    %c0_219 = arith.constant 0 : index
    %628 = vector.load %arg9[%c0_218, %c0_219] : memref<2x16xf32, #tpu.memory_space<vmem>>, vector<2x16xf32>
    tpu.vector_store %arg9[%c0_218, %c0_219], %622 {strides = array<i32>} : memref<2x16xf32, #tpu.memory_space<vmem>>, vector<2x16xf32>,
    %c0_i32_220 = arith.constant 0 : i32
    %629 = arith.cmpi eq, %arg0, %c0_i32_220 : i32
    %630 = arith.extui %629 : i1 to i32
    %c0_i32_221 = arith.constant 0 : i32
    %631 = arith.cmpi ne, %630, %c0_i32_221 : i32
    scf.if %631 {
      %632 = tpu.concatenate %585, %624 in 1 : vector<2x16xf32>, vector<2x16xf32> -> vector<2x32xf32>
      %c0_222 = arith.constant 0 : index
      %c0_223 = arith.constant 0 : index
      %633 = vector.load %arg5[%c0_222, %c0_223] : memref<2x32xf32, #tpu.memory_space<vmem>>, vector<2x32xf32>
      tpu.vector_store %arg5[%c0_222, %c0_223], %632 {strides = array<i32>} : memref<2x32xf32, #tpu.memory_space<vmem>>, vector<2x32xf32>,
    } else {
    }
    return
  }
  func.func @transform_0(%arg0: i32) -> (i32, i32, i32) {
    %c0_i32 = arith.constant 0 : i32
    %c0_i32_0 = arith.constant 0 : i32
    %c0_i32_1 = arith.constant 0 : i32
    return %arg0, %c0_i32, %c0_i32_0 : i32, i32, i32
  }
  func.func @transform_1(%arg0: i32) -> (i32, i32, i32) {
    %c0_i32 = arith.constant 0 : i32
    %0 = arith.subi %c0_i32, %arg0 : i32
    %c0_i32_0 = arith.constant 0 : i32
    %c0_i32_1 = arith.constant 0 : i32
    %c0_i32_2 = arith.constant 0 : i32
    return %0, %c0_i32_0, %c0_i32_1 : i32, i32, i32
  }
  func.func @transform_2(%arg0: i32) -> (i32, i32) {
    %c0_i32 = arith.constant 0 : i32
    %c0_i32_0 = arith.constant 0 : i32
    %c0_i32_1 = arith.constant 0 : i32
    return %c0_i32, %c0_i32_0 : i32, i32
  }
  func.func @transform_3(%arg0: i32) -> (i32, i32) {
    %c0_i32 = arith.constant 0 : i32
    %c0_i32_0 = arith.constant 0 : i32
    %c0_i32_1 = arith.constant 0 : i32
    return %c0_i32, %c0_i32_0 : i32, i32
  }
  func.func @transform_4(%arg0: i32) -> (i32, i32) {
    %c0_i32 = arith.constant 0 : i32
    %c0_i32_0 = arith.constant 0 : i32
    %c0_i32_1 = arith.constant 0 : i32
    return %c0_i32, %c0_i32_0 : i32, i32
  }
}

module attributes {stable_mosaic.version = 11 : i64} {
  func.func @_input_proj_kernel(%arg0: i32, %arg1: memref<16x300xbf16, #tpu.memory_space<vmem>>, %arg2: memref<300x128xbf16, #tpu.memory_space<vmem>>, %arg3: memref<1x128xf32, #tpu.memory_space<vmem>>, %arg4: memref<16x64xbf16, #tpu.memory_space<vmem>>, %arg5: memref<16x64xbf16, #tpu.memory_space<vmem>>) attributes {dimension_semantics = [#tpu.dimension_semantics<parallel>], iteration_bounds = array<i64: 1>, scalar_prefetch = 0 : i64, scratch_operands = 0 : i64, tpu.core_type = #tpu.core_type<tc>, window_params = [{transform_indices = @transform_0, window_bounds = array<i64: 16, 300>}, {pipeline_mode = #tpu.pipeline_mode<synchronous>, transform_indices = @transform_1, window_bounds = array<i64: 300, 128>}, {pipeline_mode = #tpu.pipeline_mode<synchronous>, transform_indices = @transform_2, window_bounds = array<i64: 1, 128>}, {transform_indices = @transform_3, window_bounds = array<i64: 16, 64>}, {transform_indices = @transform_4, window_bounds = array<i64: 16, 64>}]} {
    %c0 = arith.constant 0 : index
    %c0_0 = arith.constant 0 : index
    %0 = vector.load %arg1[%c0, %c0_0] : memref<16x300xbf16, #tpu.memory_space<vmem>>, vector<16x300xbf16>
    %c0_1 = arith.constant 0 : index
    %c0_2 = arith.constant 0 : index
    %1 = vector.load %arg2[%c0_1, %c0_2] : memref<300x128xbf16, #tpu.memory_space<vmem>>, vector<300x128xbf16>
    %cst = arith.constant dense<0.000000e+00> : vector<16x128xf32>
    %2 = tpu.matmul %0, %1, %cst {dimension_numbers = #tpu.dot_dimension_numbers<[1], [0], [0], [1], [0, 0, 1, 1], [], []>} : vector<16x300xbf16>, vector<300x128xbf16>, vector<16x128xf32> -> vector<16x128xf32>
    %c0_3 = arith.constant 0 : index
    %c0_4 = arith.constant 0 : index
    %3 = vector.load %arg3[%c0_3, %c0_4] : memref<1x128xf32, #tpu.memory_space<vmem>>, vector<1x128xf32>
    %4 = vector.broadcast %3 : vector<1x128xf32> to vector<16x128xf32>
    %5 = arith.addf %2, %4 : vector<16x128xf32>
    %6 = arith.truncf %5 : vector<16x128xf32> to vector<16x128xbf16>
    %7 = vector.extract_strided_slice %6 {offsets = [0, 0], sizes = [16, 64], strides = [1, 1]} : vector<16x128xbf16> to vector<16x64xbf16>
    %c0_5 = arith.constant 0 : index
    %c0_6 = arith.constant 0 : index
    %8 = vector.load %arg4[%c0_5, %c0_6] : memref<16x64xbf16, #tpu.memory_space<vmem>>, vector<16x64xbf16>
    tpu.vector_store %arg4[%c0_5, %c0_6], %7 {strides = array<i32>} : memref<16x64xbf16, #tpu.memory_space<vmem>>, vector<16x64xbf16>,
    %9 = vector.extract_strided_slice %6 {offsets = [0, 64], sizes = [16, 64], strides = [1, 1]} : vector<16x128xbf16> to vector<16x64xbf16>
    %c0_7 = arith.constant 0 : index
    %c0_8 = arith.constant 0 : index
    %10 = vector.load %arg5[%c0_7, %c0_8] : memref<16x64xbf16, #tpu.memory_space<vmem>>, vector<16x64xbf16>
    tpu.vector_store %arg5[%c0_7, %c0_8], %9 {strides = array<i32>} : memref<16x64xbf16, #tpu.memory_space<vmem>>, vector<16x64xbf16>,
    return
  }
  func.func @transform_0(%arg0: i32) -> (i32, i32) {
    %c0_i32 = arith.constant 0 : i32
    %c0_i32_0 = arith.constant 0 : i32
    return %arg0, %c0_i32 : i32, i32
  }
  func.func @transform_1(%arg0: i32) -> (i32, i32) {
    %c0_i32 = arith.constant 0 : i32
    %c0_i32_0 = arith.constant 0 : i32
    %c0_i32_1 = arith.constant 0 : i32
    return %c0_i32, %c0_i32_0 : i32, i32
  }
  func.func @transform_2(%arg0: i32) -> (i32, i32) {
    %c0_i32 = arith.constant 0 : i32
    %c0_i32_0 = arith.constant 0 : i32
    %c0_i32_1 = arith.constant 0 : i32
    return %c0_i32, %c0_i32_0 : i32, i32
  }
  func.func @transform_3(%arg0: i32) -> (i32, i32) {
    %c0_i32 = arith.constant 0 : i32
    %c0_i32_0 = arith.constant 0 : i32
    return %arg0, %c0_i32 : i32, i32
  }
  func.func @transform_4(%arg0: i32) -> (i32, i32) {
    %c0_i32 = arith.constant 0 : i32
    %c0_i32_0 = arith.constant 0 : i32
    return %arg0, %c0_i32 : i32, i32
  }
}

</mosaic_0001>

<llo_original>
// kernel: bilstm_encoder_pallas.2
$region0: #{bilstm_encoder_pallas.2}
  #allocation0 [shape = 'u32[]', space=smem, size = 0x4, offset = 0x4, fixed_abs, tag = 'smem constant byte address 0x4 - core index']
  #allocation1 [shape = 'u32[144,128]{1,0:T(1,128)}', space=vmem, size = 0x12000, scoped, tag = 'internal scratch']
  %s0 = inlined_call_operand.vmem [shape: bf16[16,300], index: 0, kind: input, shape index: {}]
  %s1 = inlined_call_operand.vmem [shape: bf16[300,128], index: 1, kind: input, shape index: {}]
  %s2 = inlined_call_operand.vmem [shape: f32[1,128], index: 2, kind: input, shape index: {}]
  %s3 = inlined_call_operand.vmem [shape: bf16[16,64], index: 3, kind: output, shape index: {0}]
  %s4 = inlined_call_operand.vmem [shape: bf16[16,64], index: 4, kind: output, shape index: {1}]
  %5 = xla_tuple %s3, %s4
  %s6 = sld [smem:[#allocation0]]
  $region30: #{bilstm_encoder_pallas.2} parent=0
    _
  %s8 = ssub.s32 1, %s6
  %s9 = scalar_select 0, %s8, %s6
  // Predicated region
  $region2: #{bilstm_encoder_pallas.2} parent=0 // pred_check
    _
  $region3: #{bilstm_encoder_pallas.2} parent=0 // pred_check_branch
    %11 = sbr.rel (0) target = $region5
  $region4: #{bilstm_encoder_pallas.2} parent=0 // pred_region
    _
  $region5: #{bilstm_encoder_pallas.2} parent=0 // pred_fallthru
    _
  // Predicated region
  $region6: #{bilstm_encoder_pallas.2} parent=0 // pred_check
    _
  $region7: #{bilstm_encoder_pallas.2} parent=0 // pred_check_branch
    %13 = sbr.rel (0) target = $region9
  $region8: #{bilstm_encoder_pallas.2} parent=0 // pred_region
    _
  $region9: #{bilstm_encoder_pallas.2} parent=0 // pred_fallthru
    _
  // Predicated region
  $region10: #{bilstm_encoder_pallas.2} parent=0 // pred_check
    _
  $region11: #{bilstm_encoder_pallas.2} parent=0 // pred_check_branch
    %15 = sbr.rel (0) target = $region13
  $region12: #{bilstm_encoder_pallas.2} parent=0 // pred_region
    _
  $region13: #{bilstm_encoder_pallas.2} parent=0 // pred_fallthru
    _
  %v17 = vld [vmem:[%s0] sm:$0xff]
  %v18 = vld [vmem:[%s0 + $0x8] sm:$0xf]
  %v19 = vld [vmem:[%s0 + $0xc] sm:$0xff]
  %v20 = vld [vmem:[%s0 + $0x14] sm:$0xf]
  %v21 = vld [vmem:[%s1] sm:$0xf]
  %v22 = vld [vmem:[%s1 + $0x4] sm:$0xf]
  %v23 = vld [vmem:[%s1 + $0x8] sm:$0xf]
  %v24 = vld [vmem:[%s1 + $0xc] sm:$0xf]
  %v25 = vld [vmem:[%s1 + $0x10] sm:$0xf]
  %v26 = vld [vmem:[%s1 + $0x14] sm:$0xf]
  %v27 = vld [vmem:[%s1 + $0x18] sm:$0xf]
  %v28 = vld [vmem:[%s1 + $0x1c] sm:$0xf]
  %v29 = vld [vmem:[%s1 + $0x20] sm:$0xf]
  %v30 = vld [vmem:[%s1 + $0x24] sm:$0xf]
  %v31 = vld [vmem:[%s1 + $0x28] sm:$0xf]
  %v32 = vld [vmem:[%s1 + $0x2c] sm:$0xf]
  %v33 = vld [vmem:[%s1 + $0x30] sm:$0xf]
  %v34 = vld [vmem:[%s1 + $0x34] sm:$0xf]
  %v35 = vld [vmem:[%s1 + $0x38] sm:$0xf]
  %v36 = vld [vmem:[%s1 + $0x3c] sm:$0xf]
  %v37 = vld [vmem:[%s1 + $0x40] sm:$0xf]
  %v38 = vld [vmem:[%s1 + $0x44] sm:$0xf]
  %v39 = vld [vmem:[%s1 + $0x48] sm:$0xf]
  %v40 = vld [vmem:[%s1 + $0x4c] sm:$0xf]
  %v41 = vld [vmem:[%s1 + $0x50] sm:$0xf]
  %v42 = vld [vmem:[%s1 + $0x54] sm:$0xf]
  %v43 = vld [vmem:[%s1 + $0x58] sm:$0xf]
  %v44 = vld [vmem:[%s1 + $0x5c] sm:$0xf]
  %v45 = vld [vmem:[%s1 + $0x60] sm:$0xf]
  %v46 = vld [vmem:[%s1 + $0x64] sm:$0xf]
  %v47 = vld [vmem:[%s1 + $0x68] sm:$0xf]
  %v48 = vld [vmem:[%s1 + $0x6c] sm:$0xf]
  %v49 = vld [vmem:[%s1 + $0x70] sm:$0xf]
  %v50 = vld [vmem:[%s1 + $0x74] sm:$0xf]
  %v51 = vld [vmem:[%s1 + $0x78] sm:$0xf]
  %v52 = vld [vmem:[%s1 + $0x7c] sm:$0xf]
  %v53 = vld [vmem:[%s1 + $0x80] sm:$0xf]
  %v54 = vld [vmem:[%s1 + $0x84] sm:$0xf]
  %v55 = vld [vmem:[%s1 + $0x88] sm:$0xf]
  %v56 = vld [vmem:[%s1 + $0x8c] sm:$0xf]
  %v57 = vld [vmem:[%s1 + $0x90] sm:$0xf]
  %v58 = vld [vmem:[%s1 + $0x94] sm:$0x3]
  %v59 = vld [vmem:[%s2] sm:$0x1]
  %v61 = vlaneseq
  %v62 = vshrl.u32 %v61, 7
  %v63 = vsub.s32 0, %v62
  %v64 = vrot.slane %v59, %v63
  %v70 = vunpack.c.l.b16 %v17
  %v71 = vunpack.c.h.b16 %v17
  %v72 = vunpack.c.l.b16 %v18
  %v73 = vunpack.c.l.b16 %v19
  %v74 = vunpack.c.h.b16 %v19
  %v75 = vunpack.c.l.b16 %v20
  %v76 = vpack.c.b16 %v73, %v70
  %v77 = vpack.c.b16 %v74, %v71
  %v78 = vpack.c.b16 %v75, %v72
  %v119 = vunpack.c.l.b16 %v21
  %v120 = vunpack.c.l.b16 %v22
  %v121 = vunpack.c.l.b16 %v23
  %v122 = vunpack.c.l.b16 %v24
  %v123 = vunpack.c.l.b16 %v25
  %v124 = vunpack.c.l.b16 %v26
  %v125 = vunpack.c.l.b16 %v27
  %v126 = vunpack.c.l.b16 %v28
  %v127 = vunpack.c.l.b16 %v29
  %v128 = vunpack.c.l.b16 %v30
  %v129 = vunpack.c.l.b16 %v31
  %v130 = vunpack.c.l.b16 %v32
  %v131 = vunpack.c.l.b16 %v33
  %v132 = vunpack.c.l.b16 %v34
  %v133 = vunpack.c.l.b16 %v35
  %v134 = vunpack.c.l.b16 %v36
  %v135 = vunpack.c.l.b16 %v37
  %v136 = vunpack.c.l.b16 %v38
  %v137 = vunpack.c.l.b16 %v39
  %v138 = vunpack.c.l.b16 %v40
  %v139 = vunpack.c.l.b16 %v41
  %v140 = vunpack.c.l.b16 %v42
  %v141 = vunpack.c.l.b16 %v43
  %v142 = vunpack.c.l.b16 %v44
  %v143 = vunpack.c.l.b16 %v45
  %v144 = vunpack.c.l.b16 %v46
  %v145 = vunpack.c.l.b16 %v47
  %v146 = vunpack.c.l.b16 %v48
  %v147 = vunpack.c.l.b16 %v49
  %v148 = vunpack.c.l.b16 %v50
  %v149 = vunpack.c.l.b16 %v51
  %v150 = vunpack.c.l.b16 %v52
  %v151 = vunpack.c.l.b16 %v53
  %v152 = vunpack.c.l.b16 %v54
  %v153 = vunpack.c.l.b16 %v55
  %v154 = vunpack.c.l.b16 %v56
  %v155 = vunpack.c.l.b16 %v57
  %v156 = vunpack.c.l.b16 %v58
  %v157 = vpack.c.b16 %v120, %v119
  %v158 = vpack.c.b16 %v122, %v121
  %v159 = vpack.c.b16 %v124, %v123
  %v160 = vpack.c.b16 %v126, %v125
  %v161 = vpack.c.b16 %v128, %v127
  %v162 = vpack.c.b16 %v130, %v129
  %v163 = vpack.c.b16 %v132, %v131
  %v164 = vpack.c.b16 %v134, %v133
  %v165 = vpack.c.b16 %v136, %v135
  %v166 = vpack.c.b16 %v138, %v137
  %v167 = vpack.c.b16 %v140, %v139
  %v168 = vpack.c.b16 %v142, %v141
  %v169 = vpack.c.b16 %v144, %v143
  %v170 = vpack.c.b16 %v146, %v145
  %v171 = vpack.c.b16 %v148, %v147
  %v172 = vpack.c.b16 %v150, %v149
  %v173 = vpack.c.b16 %v152, %v151
  %v174 = vpack.c.b16 %v154, %v153
  %v175 = vpack.c.b16 %v156, %v155
  %vm194 = vcmask 359424
  %v196 = vsel %vm194, %v78, 0
  %vm198 = vcmask 1045504
  %v200 = vsel %vm198, %v175, 0
  %202 = vmatprep.subr.bf16.mxu0 0
  %203 = vmatpush1.bf16.msra.mxu0 %v157
  %204 = vmatprep.subr.bf16.mxu0 0
  %205 = vmatpush1.bf16.msra.mxu0 %v158
  %206 = vmatprep.subr.bf16.mxu0 0
  %207 = vmatpush1.bf16.msra.mxu0 %v159
  %208 = vmatprep.subr.bf16.mxu0 0
  %209 = vmatpush1.bf16.msra.mxu0 %v160
  %210 = vmatprep.subr.bf16.mxu0 0
  %211 = vmatpush1.bf16.msra.mxu0 %v161
  %212 = vmatprep.subr.bf16.mxu0 0
  %213 = vmatpush1.bf16.msra.mxu0 %v162
  %214 = vmatprep.subr.bf16.mxu0 0
  %215 = vmatpush1.bf16.msra.mxu0 %v163
  %216 = vmatprep.subr.bf16.mxu0 0
  %217 = vmatpush1.bf16.msra.mxu0 %v164
  %218 = vmatprep.subr.bf16.mxu0 0
  %219 = vmatpush1.bf16.msra.mxu0 %v165
  %220 = vmatprep.subr.bf16.mxu0 0
  %221 = vmatpush1.bf16.msra.mxu0 %v166
  %222 = vmatprep.subr.bf16.mxu0 0
  %223 = vmatpush1.bf16.msra.mxu0 %v167
  %224 = vmatprep.subr.bf16.mxu0 0
  %225 = vmatpush1.bf16.msra.mxu0 %v168
  %226 = vmatprep.subr.bf16.mxu0 0
  %227 = vmatpush1.bf16.msra.mxu0 %v169
  %228 = vmatprep.subr.bf16.mxu0 0
  %229 = vmatpush1.bf16.msra.mxu0 %v170
  %230 = vmatprep.subr.bf16.mxu0 0
  %231 = vmatpush1.bf16.msra.mxu0 %v171
  %232 = vmatprep.subr.bf16.mxu0 0
  %233 = vmatpush1.bf16.msra.mxu0 %v172
  %234 = vmatprep.mubr.bf16.mxu0 %v77
  %235 = vmatmul.mubr.bf16.gmra.mrb[0].mxu0 %v76
  %v236 = vpop.f32.mrb[0].mxu0
  %v237 = vadd.f32 %v64, %v236
  %v238 = vpop.f32.mrb[0].mxu0
  %v239 = vpop.f32.mrb[0].mxu0
  %v240 = vadd.f32 %v64, %v239
  %v241 = vpop.f32.mrb[0].mxu0
  %242 = vdwg.mxu0
  %243 = vmatprep.subr.bf16.mxu0 0
  %244 = vmatpush1.bf16.msra.mxu0 %v173
  %245 = vmatprep.subr.bf16.mxu0 0
  %246 = vmatpush1.bf16.msra.mxu0 %v174
  %247 = vmatprep.subr.bf16.mxu0 0
  %248 = vmatpush1.bf16.msra.mxu0 %v200
  %249 = vmatprep.subr.bf16.mxu0 0
  %250 = vmatpush1.bf16.msra.mxu0 0
  %251 = vmatprep.subr.bf16.mxu0 0
  %252 = vmatpush1.bf16.msra.mxu0 0
  %253 = vmatprep.subr.bf16.mxu0 0
  %254 = vmatpush1.bf16.msra.mxu0 0
  %255 = vmatprep.subr.bf16.mxu0 0
  %256 = vmatpush1.bf16.msra.mxu0 0
  %257 = vmatprep.subr.bf16.mxu0 0
  %258 = vmatpush1.bf16.msra.mxu0 0
  %259 = vmatprep.subr.bf16.mxu0 0
  %260 = vmatpush1.bf16.msra.mxu0 0
  %261 = vmatprep.subr.bf16.mxu0 0
  %262 = vmatpush1.bf16.msra.mxu0 0
  %263 = vmatprep.subr.bf16.mxu0 0
  %264 = vmatpush1.bf16.msra.mxu0 0
  %265 = vmatprep.subr.bf16.mxu0 0
  %266 = vmatpush1.bf16.msra.mxu0 0
  %267 = vmatprep.subr.bf16.mxu0 0
  %268 = vmatpush1.bf16.msra.mxu0 0
  %269 = vmatprep.subr.bf16.mxu0 0
  %270 = vmatpush1.bf16.msra.mxu0 0
  %271 = vmatprep.subr.bf16.mxu0 0
  %272 = vmatpush1.bf16.msra.mxu0 0
  %273 = vmatprep.subr.bf16.mxu0 0
  %274 = vmatpush1.bf16.msra.mxu0 0
  %275 = vmatprep.mubr.bf16.mxu0 0
  %276 = vmatmul.mubr.bf16.gmra.mrb[0].mxu0 %v196
  %v277 = vpop.f32.mrb[0].mxu0
  %v278 = vadd.f32 %v237, %v277
  %v279 = vpop.f32.mrb[0].mxu0
  %v280 = vpop.f32.mrb[0].mxu0
  %v281 = vadd.f32 %v240, %v280
  %v282 = vpop.f32.mrb[0].mxu0
  %283 = vdwg.mxu0
  %v284 = vpack.c.bf16 %v281, %v278
  %v286 = vunpack.c.l.b16 %v284
  %v287 = vunpack.c.h.b16 %v284
  %v288 = vpack.c.b16 %v286, %v286
  %v289 = vpack.c.b16 %v287, %v287
  %vm292 = vcmask 519168
  %293 = vst.msk [vmem:[%s3] sm:$0xf] %vm292, %v288
  %294 = vst.msk [vmem:[%s3 + $0x4] sm:$0xf] %vm292, %v289
  %295 = vrot.lane.b32.xlu0 %v288, 64
  %v296 = vpop.permute.xlu0 %295
  %297 = vrot.lane.b32.xlu0 %v289, 64
  %v298 = vpop.permute.xlu0 %297
  %301 = vst.msk [vmem:[%s4] sm:$0xf] %vm292, %v296
  %302 = vst.msk [vmem:[%s4 + $0x4] sm:$0xf] %vm292, %v298
  // Predicated region
  $region14: #{bilstm_encoder_pallas.2} parent=0 // pred_check
    _
  $region15: #{bilstm_encoder_pallas.2} parent=0 // pred_check_branch
    %304 = sbr.rel (0) target = $region17
  $region16: #{bilstm_encoder_pallas.2} parent=0 // pred_region
    _
  $region17: #{bilstm_encoder_pallas.2} parent=0 // pred_fallthru
    _
  // Predicated region
  $region18: #{bilstm_encoder_pallas.2} parent=0 // pred_check
    _
  $region19: #{bilstm_encoder_pallas.2} parent=0 // pred_check_branch
    %306 = sbr.rel (0) target = $region21
  $region20: #{bilstm_encoder_pallas.2} parent=0 // pred_region
    _
  $region21: #{bilstm_encoder_pallas.2} parent=0 // pred_fallthru
    _
  // Predicated region
  $region22: #{bilstm_encoder_pallas.2} parent=0 // pred_check
    _
  $region23: #{bilstm_encoder_pallas.2} parent=0 // pred_check_branch
    %308 = sbr.rel (0) target = $region25
  $region24: #{bilstm_encoder_pallas.2} parent=0 // pred_region
    _
  $region25: #{bilstm_encoder_pallas.2} parent=0 // pred_fallthru
    _
  // Predicated region
  $region26: #{bilstm_encoder_pallas.2} parent=0 // pred_check
    _
  $region27: #{bilstm_encoder_pallas.2} parent=0 // pred_check_branch
    %310 = sbr.rel (0) target = $region29
  $region28: #{bilstm_encoder_pallas.2} parent=0 // pred_region
    _
  $region29: #{bilstm_encoder_pallas.2} parent=0 // pred_fallthru
    _

// kernel: bilstm_encoder_pallas.3
$region0: #{bilstm_encoder_pallas.3}
  #allocation0 [shape = 'u32[]', space=smem, size = 0x4, offset = 0x4, fixed_abs, tag = 'smem constant byte address 0x4 - core index']
  #allocation1 [shape = 'u32[144,128]{1,0:T(1,128)}', space=vmem, size = 0x12000, scoped, tag = 'internal scratch']
  #allocation2 [shape = 'f32[2,16]{1,0:T(2,128)}', space=vmem, size = 0x400, scoped, tag = 'scratch operand']
  #allocation3 [shape = 'f32[2,16]{1,0:T(2,128)}', space=vmem, size = 0x400, scoped, tag = 'scratch operand']
  #allocation4 [shape = 'f32[2,16]{1,0:T(2,128)}', space=vmem, size = 0x400, scoped, tag = 'scratch operand']
  #allocation5 [shape = 'f32[2,16]{1,0:T(2,128)}', space=vmem, size = 0x400, scoped, tag = 'scratch operand']
  %s0 = inlined_call_operand.vmem [shape: bf16[8,2,64], index: 0, kind: input, shape index: {}]
  %s1 = inlined_call_operand.vmem [shape: bf16[8,2,64], index: 1, kind: input, shape index: {}]
  %s2 = inlined_call_operand.vmem [shape: bf16[16,64], index: 2, kind: input, shape index: {}]
  %s3 = inlined_call_operand.vmem [shape: bf16[16,64], index: 3, kind: input, shape index: {}]
  %s4 = inlined_call_operand.hbm [shape: f32[2,32], index: 4, kind: output, shape index: {}]
  %s5 = sld [smem:[#allocation0]]
  $region34: #{bilstm_encoder_pallas.3} parent=0
    _
  %s7 = ssub.s32 1, %s5
  %s8 = scalar_select 0, %s7, %s5
  $region1: #{bilstm_encoder_pallas.3} parent=0
    #allocation6 [shape = 'u8[1024]{0}', space=vmem, size = 0x400, scoped, tag = 'output window, operand 0, single buffered']
    #allocation7 [shape = 's32[1]{0}', space=sflag, size = 0x4, scoped, tag = 'scoped memory for bilstm_encoder_pallas.3']
    %9 = vsyncpa [#allocation7], 0
    // Predicated region
    $region2: #{bilstm_encoder_pallas.3} parent=1 // pred_check
      _
    $region3: #{bilstm_encoder_pallas.3} parent=1 // pred_check_branch
      %11 = sbr.rel (0) target = $region5
    $region4: #{bilstm_encoder_pallas.3} parent=1 // pred_region
      _
    $region5: #{bilstm_encoder_pallas.3} parent=1 // pred_fallthru
      _
    // Predicated region
    $region6: #{bilstm_encoder_pallas.3} parent=1 // pred_check
      _
    $region7: #{bilstm_encoder_pallas.3} parent=1 // pred_check_branch
      %13 = sbr.rel (0) target = $region9
    $region8: #{bilstm_encoder_pallas.3} parent=1 // pred_region
      %s14 = ssub.s32 0, 0
      %s15 = smul.u32 8, %s14
      %p16 = scmp.lt.s32.totalorder %s15, 7
      %s17 = scalar_select %p16, %s15, 7
      %s18 = scalar_lea.vmem %s1, %s17
      %s19 = ssub.s32 0, 0
      %s20 = smul.u32 8, %s19
    $region9: #{bilstm_encoder_pallas.3} parent=1 // pred_fallthru
      _
    // Predicated region
    $region10: #{bilstm_encoder_pallas.3} parent=1 // pred_check
      _
    $region11: #{bilstm_encoder_pallas.3} parent=1 // pred_check_branch
      %22 = sbr.rel (0) target = $region13
    $region12: #{bilstm_encoder_pallas.3} parent=1 // pred_region
      _
    $region13: #{bilstm_encoder_pallas.3} parent=1 // pred_fallthru
      _
    // Predicated region
    $region14: #{bilstm_encoder_pallas.3} parent=1 // pred_check
      _
    $region15: #{bilstm_encoder_pallas.3} parent=1 // pred_check_branch
      %24 = sbr.rel (0) target = $region17
    $region16: #{bilstm_encoder_pallas.3} parent=1 // pred_region
      _
    $region17: #{bilstm_encoder_pallas.3} parent=1 // pred_fallthru
      _
    %s25 = ssub.s32 0, 0
    %s26 = smul.u32 8, %s25
    %p27 = scmp.lt.s32.totalorder %s26, 7
    %s28 = scalar_select %p27, %s26, 7
    %s29 = scalar_lea.vmem %s1, %s28
    %s30 = ssub.s32 0, 0
    %s31 = smul.u32 8, %s30
    %p32 = scmp.lt.s32.totalorder %s31, 7
    %s33 = scalar_select %p32, %s31, 7
    %s34 = scalar_lea.vmem %s1, %s33
    %s35 = ssub.s32 0, 0
    %s36 = smul.u32 8, %s35
    %p38 = scmp.eq.s32.totalorder 0, 0
    // Predicated region
    $region18: #{bilstm_encoder_pallas.3} parent=1 // pred_check
      %p39 = pneg %p38
    $region19: #{bilstm_encoder_pallas.3} parent=1 // pred_check_branch
      %41 = sbr.rel (%p39) target = $region21
    $region20: #{bilstm_encoder_pallas.3} parent=1 // pred_region
      %vm42 = vcmask 123904
      %43 = vst.msk [vmem:[#allocation2] sm:$0x3] %vm42, 0.0
      %44 = vst.msk [vmem:[#allocation3] sm:$0x3] %vm42, 0.0
      %45 = vst.msk [vmem:[#allocation4] sm:$0x3] %vm42, 0.0
      %46 = vst.msk [vmem:[#allocation5] sm:$0x3] %vm42, 0.0
    $region21: #{bilstm_encoder_pallas.3} parent=1 // pred_fallthru
      _
    %v47 = vld [vmem:[%s2] sm:$0xf]
    %v48 = vld [vmem:[%s2 + $0x4] sm:$0xf]
    %v49 = vld [vmem:[%s3] sm:$0xf]
    %v50 = vld [vmem:[%s3 + $0x4] sm:$0xf]
    %v51 = vld [vmem:[#allocation2] sm:$0x3]
    %v52 = vld [vmem:[#allocation3] sm:$0x3]
    %v53 = vld [vmem:[#allocation4] sm:$0x3]
    %v54 = vld [vmem:[#allocation5] sm:$0x3]
    %v55 = vld [vmem:[%s0] sm:$0x1]
    %v56 = vunpack.c.l.bf16 %v55
    %v57 = vpack.c.bf16 %v51, %v51
    %v60 = vunpack.c.l.b16 %v47
    %v61 = vunpack.c.l.b16 %v48
    %v62 = vpack.c.b16 %v61, %v60
    %vm64 = vcmask 130048
    %v66 = vsel %vm64, %v57, 0
    %68 = vmatprep.subr.bf16.mxu0 0
    %69 = vmatpush1.bf16.msra.mxu0 %v62
    %70 = vmatprep.subr.bf16.mxu0 0
    %71 = vmatpush1.bf16.msra.mxu0 0
    %72 = vmatprep.subr.bf16.mxu0 0
    %73 = vmatpush1.bf16.msra.mxu0 0
    %74 = vmatprep.subr.bf16.mxu0 0
    %75 = vmatpush1.bf16.msra.mxu0 0
    %76 = vmatprep.subr.bf16.mxu0 0
    %77 = vmatpush1.bf16.msra.mxu0 0
    %78 = vmatprep.subr.bf16.mxu0 0
    %79 = vmatpush1.bf16.msra.mxu0 0
    %80 = vmatprep.subr.bf16.mxu0 0
    %81 = vmatpush1.bf16.msra.mxu0 0
    %82 = vmatprep.subr.bf16.mxu0 0
    %83 = vmatpush1.bf16.msra.mxu0 0
    %84 = vmatprep.subr.bf16.mxu0 0
    %85 = vmatpush1.bf16.msra.mxu0 0
    %86 = vmatprep.subr.bf16.mxu0 0
    %87 = vmatpush1.bf16.msra.mxu0 0
    %88 = vmatprep.subr.bf16.mxu0 0
    %89 = vmatpush1.bf16.msra.mxu0 0
    %90 = vmatprep.subr.bf16.mxu0 0
    %91 = vmatpush1.bf16.msra.mxu0 0
    %92 = vmatprep.subr.bf16.mxu0 0
    %93 = vmatpush1.bf16.msra.mxu0 0
    %94 = vmatprep.subr.bf16.mxu0 0
    %95 = vmatpush1.bf16.msra.mxu0 0
    %96 = vmatprep.subr.bf16.mxu0 0
    %97 = vmatpush1.bf16.msra.mxu0 0
    %98 = vmatprep.subr.bf16.mxu0 0
    %99 = vmatpush1.bf16.msra.mxu0 0
    %100 = vmatprep.mubr.bf16.mxu0 0
    %101 = vmatmul.mubr.bf16.gmra.mrb[0].mxu0 %v66
    %v102 = vpop.f32.mrb[0].mxu0
    %v103 = vadd.f32 0.0, %v102
    %v104 = vpop.f32.mrb[0].mxu0
    %v105 = vpop.f32.mrb[0].mxu0
    %v106 = vpop.f32.mrb[0].mxu0
    %107 = vdwg.mxu0
    %v108 = vadd.f32 %v56, %v103
    %v109 = vmul.f32 %v108, 0.5
    %v110 = vtanh.pop %v109
    %v111 = vmul.f32 %v110, 0.5
    %v112 = vadd.f32 %v111, 0.5
    %v113 = vtanh.pop %v108
    %v116 = vunpack.c.l.s4 1983009808
    %v117 = vunpack.c.0.s8 %v116
    %v118 = vlaneseq
    %v119 = vshrl.u32 %v118, 7
    %v120 = vsub.s32 %v117, %v119
    %v121 = vrot.slane %v52, %v120
    %122 = vrot.lane.b32.xlu0 %v121, 16
    %v123 = vpop.permute.xlu0 %122
    %v125 = vmul.f32 %v112, %v123
    %127 = vrot.lane.b32.xlu0 %v113, 96
    %v128 = vpop.permute.xlu0 %127
    %v130 = vmul.f32 %v112, %v128
    %132 = vrot.lane.b32.xlu0 %v130, 16
    %v133 = vpop.permute.xlu0 %132
    %v135 = vadd.f32 %v125, %v133
    %v136 = vtanh.pop %v135
    %138 = vrot.lane.b32.xlu0 %v136, 32
    %v139 = vpop.permute.xlu0 %138
    %v141 = vmul.f32 %v112, %v139
    %s142 = scalar_lea.vmem %s34, 7
    %v143 = vld [vmem:[%s142] sm:$0x1]
    %v144 = vunpack.c.l.bf16 %v143
    %v145 = vpack.c.bf16 %v53, %v53
    %v148 = vunpack.c.l.b16 %v49
    %v149 = vunpack.c.l.b16 %v50
    %v150 = vpack.c.b16 %v149, %v148
    %v153 = vsel %vm64, %v145, 0
    %155 = vmatprep.subr.bf16.mxu0 0
    %156 = vmatpush1.bf16.msra.mxu0 %v150
    %157 = vmatprep.subr.bf16.mxu0 0
    %158 = vmatpush1.bf16.msra.mxu0 0
    %159 = vmatprep.subr.bf16.mxu0 0
    %160 = vmatpush1.bf16.msra.mxu0 0
    %161 = vmatprep.subr.bf16.mxu0 0
    %162 = vmatpush1.bf16.msra.mxu0 0
    %163 = vmatprep.subr.bf16.mxu0 0
    %164 = vmatpush1.bf16.msra.mxu0 0
    %165 = vmatprep.subr.bf16.mxu0 0
    %166 = vmatpush1.bf16.msra.mxu0 0
    %167 = vmatprep.subr.bf16.mxu0 0
    %168 = vmatpush1.bf16.msra.mxu0 0
    %169 = vmatprep.subr.bf16.mxu0 0
    %170 = vmatpush1.bf16.msra.mxu0 0
    %171 = vmatprep.subr.bf16.mxu0 0
    %172 = vmatpush1.bf16.msra.mxu0 0
    %173 = vmatprep.subr.bf16.mxu0 0
    %174 = vmatpush1.bf16.msra.mxu0 0
    %175 = vmatprep.subr.bf16.mxu0 0
    %176 = vmatpush1.bf16.msra.mxu0 0
    %177 = vmatprep.subr.bf16.mxu0 0
    %178 = vmatpush1.bf16.msra.mxu0 0
    %179 = vmatprep.subr.bf16.mxu0 0
    %180 = vmatpush1.bf16.msra.mxu0 0
    %181 = vmatprep.subr.bf16.mxu0 0
    %182 = vmatpush1.bf16.msra.mxu0 0
    %183 = vmatprep.subr.bf16.mxu0 0
    %184 = vmatpush1.bf16.msra.mxu0 0
    %185 = vmatprep.subr.bf16.mxu0 0
    %186 = vmatpush1.bf16.msra.mxu0 0
    %187 = vmatprep.mubr.bf16.mxu0 0
    %188 = vmatmul.mubr.bf16.gmra.mrb[0].mxu0 %v153
    %v189 = vpop.f32.mrb[0].mxu0
    %v190 = vadd.f32 0.0, %v189
    %v191 = vpop.f32.mrb[0].mxu0
    %v192 = vpop.f32.mrb[0].mxu0
    %v193 = vpop.f32.mrb[0].mxu0
    %194 = vdwg.mxu0
    %v195 = vadd.f32 %v144, %v190
    %v196 = vmul.f32 %v195, 0.5
    %v197 = vtanh.pop %v196
    %v198 = vmul.f32 %v197, 0.5
    %v199 = vadd.f32 %v198, 0.5
    %v200 = vtanh.pop %v195
    %v203 = vunpack.c.l.s4 1983009808
    %v204 = vunpack.c.0.s8 %v203
    %v205 = vlaneseq
    %v206 = vshrl.u32 %v205, 7
    %v207 = vsub.s32 %v204, %v206
    %v208 = vrot.slane %v54, %v207
    %209 = vrot.lane.b32.xlu0 %v208, 16
    %v210 = vpop.permute.xlu0 %209
    %v212 = vmul.f32 %v199, %v210
    %214 = vrot.lane.b32.xlu0 %v200, 96
    %v215 = vpop.permute.xlu0 %214
    %v217 = vmul.f32 %v199, %v215
    %219 = vrot.lane.b32.xlu0 %v217, 16
    %v220 = vpop.permute.xlu0 %219
    %v222 = vadd.f32 %v212, %v220
    %v223 = vtanh.pop %v222
    %225 = vrot.lane.b32.xlu0 %v223, 32
    %v226 = vpop.permute.xlu0 %225
    %v228 = vmul.f32 %v199, %v226
    %s229 = scalar_lea.vmem %s0, 1
    %v230 = vld [vmem:[%s229] sm:$0x1]
    %v231 = vunpack.c.l.bf16 %v230
    %v232 = vpack.c.bf16 %v141, %v141
    %234 = vrot.lane.b32.xlu0 %v232, 80
    %v235 = vpop.permute.xlu0 %234
    %v237 = vsel %vm64, %v235, 0
    %239 = vmatprep.subr.bf16.mxu0 0
    %240 = vmatpush1.bf16.msra.mxu0 %v62
    %241 = vmatprep.subr.bf16.mxu0 0
    %242 = vmatpush1.bf16.msra.mxu0 0
    %243 = vmatprep.subr.bf16.mxu0 0
    %244 = vmatpush1.bf16.msra.mxu0 0
    %245 = vmatprep.subr.bf16.mxu0 0
    %246 = vmatpush1.bf16.msra.mxu0 0
    %247 = vmatprep.subr.bf16.mxu0 0
    %248 = vmatpush1.bf16.msra.mxu0 0
    %249 = vmatprep.subr.bf16.mxu0 0
    %250 = vmatpush1.bf16.msra.mxu0 0
    %251 = vmatprep.subr.bf16.mxu0 0
    %252 = vmatpush1.bf16.msra.mxu0 0
    %253 = vmatprep.subr.bf16.mxu0 0
    %254 = vmatpush1.bf16.msra.mxu0 0
    %255 = vmatprep.subr.bf16.mxu0 0
    %256 = vmatpush1.bf16.msra.mxu0 0
    %257 = vmatprep.subr.bf16.mxu0 0
    %258 = vmatpush1.bf16.msra.mxu0 0
    %259 = vmatprep.subr.bf16.mxu0 0
    %260 = vmatpush1.bf16.msra.mxu0 0
    %261 = vmatprep.subr.bf16.mxu0 0
    %262 = vmatpush1.bf16.msra.mxu0 0
    %263 = vmatprep.subr.bf16.mxu0 0
    %264 = vmatpush1.bf16.msra.mxu0 0
    %265 = vmatprep.subr.bf16.mxu0 0
    %266 = vmatpush1.bf16.msra.mxu0 0
    %267 = vmatprep.subr.bf16.mxu0 0
    %268 = vmatpush1.bf16.msra.mxu0 0
    %269 = vmatprep.subr.bf16.mxu0 0
    %270 = vmatpush1.bf16.msra.mxu0 0
    %271 = vmatprep.mubr.bf16.mxu0 0
    %272 = vmatmul.mubr.bf16.gmra.mrb[0].mxu0 %v237
    %v273 = vpop.f32.mrb[0].mxu0
    %v274 = vadd.f32 0.0, %v273
    %v275 = vpop.f32.mrb[0].mxu0
    %v276 = vpop.f32.mrb[0].mxu0
    %v277 = vpop.f32.mrb[0].mxu0
    %278 = vdwg.mxu0
    %v279 = vadd.f32 %v231, %v274
    %v280 = vmul.f32 %v279, 0.5
    %v281 = vtanh.pop %v280
    %v282 = vmul.f32 %v281, 0.5
    %v283 = vadd.f32 %v282, 0.5
    %v284 = vtanh.pop %v279
    %v285 = vmul.f32 %v283, %v135
    %287 = vrot.lane.b32.xlu0 %v284, 96
    %v288 = vpop.permute.xlu0 %287
    %v290 = vmul.f32 %v283, %v288
    %292 = vrot.lane.b32.xlu0 %v290, 16
    %v293 = vpop.permute.xlu0 %292
    %v295 = vadd.f32 %v285, %v293
    %v296 = vtanh.pop %v295
    %298 = vrot.lane.b32.xlu0 %v296, 32
    %v299 = vpop.permute.xlu0 %298
    %v301 = vmul.f32 %v283, %v299
    %s302 = scalar_lea.vmem %s34, 6
    %v303 = vld [vmem:[%s302] sm:$0x1]
    %v304 = vunpack.c.l.bf16 %v303
    %v305 = vpack.c.bf16 %v228, %v228
    %307 = vrot.lane.b32.xlu0 %v305, 80
    %v308 = vpop.permute.xlu0 %307
    %v310 = vsel %vm64, %v308, 0
    %312 = vmatprep.subr.bf16.mxu0 0
    %313 = vmatpush1.bf16.msra.mxu0 %v150
    %314 = vmatprep.subr.bf16.mxu0 0
    %315 = vmatpush1.bf16.msra.mxu0 0
    %316 = vmatprep.subr.bf16.mxu0 0
    %317 = vmatpush1.bf16.msra.mxu0 0
    %318 = vmatprep.subr.bf16.mxu0 0
    %319 = vmatpush1.bf16.msra.mxu0 0
    %320 = vmatprep.subr.bf16.mxu0 0
    %321 = vmatpush1.bf16.msra.mxu0 0
    %322 = vmatprep.subr.bf16.mxu0 0
    %323 = vmatpush1.bf16.msra.mxu0 0
    %324 = vmatprep.subr.bf16.mxu0 0
    %325 = vmatpush1.bf16.msra.mxu0 0
    %326 = vmatprep.subr.bf16.mxu0 0
    %327 = vmatpush1.bf16.msra.mxu0 0
    %328 = vmatprep.subr.bf16.mxu0 0
    %329 = vmatpush1.bf16.msra.mxu0 0
    %330 = vmatprep.subr.bf16.mxu0 0
    %331 = vmatpush1.bf16.msra.mxu0 0
    %332 = vmatprep.subr.bf16.mxu0 0
    %333 = vmatpush1.bf16.msra.mxu0 0
    %334 = vmatprep.subr.bf16.mxu0 0
    %335 = vmatpush1.bf16.msra.mxu0 0
    %336 = vmatprep.subr.bf16.mxu0 0
    %337 = vmatpush1.bf16.msra.mxu0 0
    %338 = vmatprep.subr.bf16.mxu0 0
    %339 = vmatpush1.bf16.msra.mxu0 0
    %340 = vmatprep.subr.bf16.mxu0 0
    %341 = vmatpush1.bf16.msra.mxu0 0
    %342 = vmatprep.subr.bf16.mxu0 0
    %343 = vmatpush1.bf16.msra.mxu0 0
    %344 = vmatprep.mubr.bf16.mxu0 0
    %345 = vmatmul.mubr.bf16.gmra.mrb[0].mxu0 %v310
    %v346 = vpop.f32.mrb[0].mxu0
    %v347 = vadd.f32 0.0, %v346
    %v348 = vpop.f32.mrb[0].mxu0
    %v349 = vpop.f32.mrb[0].mxu0
    %v350 = vpop.f32.mrb[0].mxu0
    %351 = vdwg.mxu0
    %v352 = vadd.f32 %v304, %v347
    %v353 = vmul.f32 %v352, 0.5
    %v354 = vtanh.pop %v353
    %v355 = vmul.f32 %v354, 0.5
    %v356 = vadd.f32 %v355, 0.5
    %v357 = vtanh.pop %v352
    %v358 = vmul.f32 %v356, %v222
    %360 = vrot.lane.b32.xlu0 %v357, 96
    %v361 = vpop.permute.xlu0 %360
    %v363 = vmul.f32 %v356, %v361
    %365 = vrot.lane.b32.xlu0 %v363, 16
    %v366 = vpop.permute.xlu0 %365
    %v368 = vadd.f32 %v358, %v366
    %v369 = vtanh.pop %v368
    %371 = vrot.lane.b32.xlu0 %v369, 32
    %v372 = vpop.permute.xlu0 %371
    %v374 = vmul.f32 %v356, %v372
    %s375 = scalar_lea.vmem %s0, 2
    %v376 = vld [vmem:[%s375] sm:$0x1]
    %v377 = vunpack.c.l.bf16 %v376
    %v378 = vpack.c.bf16 %v301, %v301
    %380 = vrot.lane.b32.xlu0 %v378, 80
    %v381 = vpop.permute.xlu0 %380
    %v383 = vsel %vm64, %v381, 0
    %385 = vmatprep.subr.bf16.mxu0 0
    %386 = vmatpush1.bf16.msra.mxu0 %v62
    %387 = vmatprep.subr.bf16.mxu0 0
    %388 = vmatpush1.bf16.msra.mxu0 0
    %389 = vmatprep.subr.bf16.mxu0 0
    %390 = vmatpush1.bf16.msra.mxu0 0
    %391 = vmatprep.subr.bf16.mxu0 0
    %392 = vmatpush1.bf16.msra.mxu0 0
    %393 = vmatprep.subr.bf16.mxu0 0
    %394 = vmatpush1.bf16.msra.mxu0 0
    %395 = vmatprep.subr.bf16.mxu0 0
    %396 = vmatpush1.bf16.msra.mxu0 0
    %397 = vmatprep.subr.bf16.mxu0 0
    %398 = vmatpush1.bf16.msra.mxu0 0
    %399 = vmatprep.subr.bf16.mxu0 0
    %400 = vmatpush1.bf16.msra.mxu0 0
    %401 = vmatprep.subr.bf16.mxu0 0
    %402 = vmatpush1.bf16.msra.mxu0 0
    %403 = vmatprep.subr.bf16.mxu0 0
    %404 = vmatpush1.bf16.msra.mxu0 0
    %405 = vmatprep.subr.bf16.mxu0 0
    %406 = vmatpush1.bf16.msra.mxu0 0
    %407 = vmatprep.subr.bf16.mxu0 0
    %408 = vmatpush1.bf16.msra.mxu0 0
    %409 = vmatprep.subr.bf16.mxu0 0
    %410 = vmatpush1.bf16.msra.mxu0 0
    %411 = vmatprep.subr.bf16.mxu0 0
    %412 = vmatpush1.bf16.msra.mxu0 0
    %413 = vmatprep.subr.bf16.mxu0 0
    %414 = vmatpush1.bf16.msra.mxu0 0
    %415 = vmatprep.subr.bf16.mxu0 0
    %416 = vmatpush1.bf16.msra.mxu0 0
    %417 = vmatprep.mubr.bf16.mxu0 0
    %418 = vmatmul.mubr.bf16.gmra.mrb[0].mxu0 %v383
    %v419 = vpop.f32.mrb[0].mxu0
    %v420 = vadd.f32 0.0, %v419
    %v421 = vpop.f32.mrb[0].mxu0
    %v422 = vpop.f32.mrb[0].mxu0
    %v423 = vpop.f32.mrb[0].mxu0
    %424 = vdwg.mxu0
    %v425 = vadd.f32 %v377, %v420
    %v426 = vmul.f32 %v425, 0.5
    %v427 = vtanh.pop %v426
    %v428 = vmul.f32 %v427, 0.5
    %v429 = vadd.f32 %v428, 0.5
    %v430 = vtanh.pop %v425
    %v431 = vmul.f32 %v429, %v295
    %433 = vrot.lane.b32.xlu0 %v430, 96
    %v434 = vpop.permute.xlu0 %433
    %v436 = vmul.f32 %v429, %v434
    %438 = vrot.lane.b32.xlu0 %v436, 16
    %v439 = vpop.permute.xlu0 %438
    %v441 = vadd.f32 %v431, %v439
    %v442 = vtanh.pop %v441
    %444 = vrot.lane.b32.xlu0 %v442, 32
    %v445 = vpop.permute.xlu0 %444
    %v447 = vmul.f32 %v429, %v445
    %s448 = scalar_lea.vmem %s34, 5
    %v449 = vld [vmem:[%s448] sm:$0x1]
    %v450 = vunpack.c.l.bf16 %v449
    %v451 = vpack.c.bf16 %v374, %v374
    %453 = vrot.lane.b32.xlu0 %v451, 80
    %v454 = vpop.permute.xlu0 %453
    %v456 = vsel %vm64, %v454, 0
    %458 = vmatprep.subr.bf16.mxu0 0
    %459 = vmatpush1.bf16.msra.mxu0 %v150
    %460 = vmatprep.subr.bf16.mxu0 0
    %461 = vmatpush1.bf16.msra.mxu0 0
    %462 = vmatprep.subr.bf16.mxu0 0
    %463 = vmatpush1.bf16.msra.mxu0 0
    %464 = vmatprep.subr.bf16.mxu0 0
    %465 = vmatpush1.bf16.msra.mxu0 0
    %466 = vmatprep.subr.bf16.mxu0 0
    %467 = vmatpush1.bf16.msra.mxu0 0
    %468 = vmatprep.subr.bf16.mxu0 0
    %469 = vmatpush1.bf16.msra.mxu0 0
    %470 = vmatprep.subr.bf16.mxu0 0
    %471 = vmatpush1.bf16.msra.mxu0 0
    %472 = vmatprep.subr.bf16.mxu0 0
    %473 = vmatpush1.bf16.msra.mxu0 0
    %474 = vmatprep.subr.bf16.mxu0 0
    %475 = vmatpush1.bf16.msra.mxu0 0
    %476 = vmatprep.subr.bf16.mxu0 0
    %477 = vmatpush1.bf16.msra.mxu0 0
    %478 = vmatprep.subr.bf16.mxu0 0
    %479 = vmatpush1.bf16.msra.mxu0 0
    %480 = vmatprep.subr.bf16.mxu0 0
    %481 = vmatpush1.bf16.msra.mxu0 0
    %482 = vmatprep.subr.bf16.mxu0 0
    %483 = vmatpush1.bf16.msra.mxu0 0
    %484 = vmatprep.subr.bf16.mxu0 0
    %485 = vmatpush1.bf16.msra.mxu0 0
    %486 = vmatprep.subr.bf16.mxu0 0
    %487 = vmatpush1.bf16.msra.mxu0 0
    %488 = vmatprep.subr.bf16.mxu0 0
    %489 = vmatpush1.bf16.msra.mxu0 0
    %490 = vmatprep.mubr.bf16.mxu0 0
    %491 = vmatmul.mubr.bf16.gmra.mrb[0].mxu0 %v456
    %v492 = vpop.f32.mrb[0].mxu0
    %v493 = vadd.f32 0.0, %v492
    %v494 = vpop.f32.mrb[0].mxu0
    %v495 = vpop.f32.mrb[0].mxu0
    %v496 = vpop.f32.mrb[0].mxu0
    %497 = vdwg.mxu0
    %v498 = vadd.f32 %v450, %v493
    %v499 = vmul.f32 %v498, 0.5
    %v500 = vtanh.pop %v499
    %v501 = vmul.f32 %v500, 0.5
    %v502 = vadd.f32 %v501, 0.5
    %v503 = vtanh.pop %v498
    %v504 = vmul.f32 %v502, %v368
    %506 = vrot.lane.b32.xlu0 %v503, 96
    %v507 = vpop.permute.xlu0 %506
    %v509 = vmul.f32 %v502, %v507
    %511 = vrot.lane.b32.xlu0 %v509, 16
    %v512 = vpop.permute.xlu0 %511
    %v514 = vadd.f32 %v504, %v512
    %v515 = vtanh.pop %v514
    %517 = vrot.lane.b32.xlu0 %v515, 32
    %v518 = vpop.permute.xlu0 %517
    %v520 = vmul.f32 %v502, %v518
    %s521 = scalar_lea.vmem %s0, 3
    %v522 = vld [vmem:[%s521] sm:$0x1]
    %v523 = vunpack.c.l.bf16 %v522
    %v524 = vpack.c.bf16 %v447, %v447
    %526 = vrot.lane.b32.xlu0 %v524, 80
    %v527 = vpop.permute.xlu0 %526
    %v529 = vsel %vm64, %v527, 0
    %531 = vmatprep.subr.bf16.mxu0 0
    %532 = vmatpush1.bf16.msra.mxu0 %v62
    %533 = vmatprep.subr.bf16.mxu0 0
    %534 = vmatpush1.bf16.msra.mxu0 0
    %535 = vmatprep.subr.bf16.mxu0 0
    %536 = vmatpush1.bf16.msra.mxu0 0
    %537 = vmatprep.subr.bf16.mxu0 0
    %538 = vmatpush1.bf16.msra.mxu0 0
    %539 = vmatprep.subr.bf16.mxu0 0
    %540 = vmatpush1.bf16.msra.mxu0 0
    %541 = vmatprep.subr.bf16.mxu0 0
    %542 = vmatpush1.bf16.msra.mxu0 0
    %543 = vmatprep.subr.bf16.mxu0 0
    %544 = vmatpush1.bf16.msra.mxu0 0
    %545 = vmatprep.subr.bf16.mxu0 0
    %546 = vmatpush1.bf16.msra.mxu0 0
    %547 = vmatprep.subr.bf16.mxu0 0
    %548 = vmatpush1.bf16.msra.mxu0 0
    %549 = vmatprep.subr.bf16.mxu0 0
    %550 = vmatpush1.bf16.msra.mxu0 0
    %551 = vmatprep.subr.bf16.mxu0 0
    %552 = vmatpush1.bf16.msra.mxu0 0
    %553 = vmatprep.subr.bf16.mxu0 0
    %554 = vmatpush1.bf16.msra.mxu0 0
    %555 = vmatprep.subr.bf16.mxu0 0
    %556 = vmatpush1.bf16.msra.mxu0 0
    %557 = vmatprep.subr.bf16.mxu0 0
    %558 = vmatpush1.bf16.msra.mxu0 0
    %559 = vmatprep.subr.bf16.mxu0 0
    %560 = vmatpush1.bf16.msra.mxu0 0
    %561 = vmatprep.subr.bf16.mxu0 0
    %562 = vmatpush1.bf16.msra.mxu0 0
    %563 = vmatprep.mubr.bf16.mxu0 0
    %564 = vmatmul.mubr.bf16.gmra.mrb[0].mxu0 %v529
    %v565 = vpop.f32.mrb[0].mxu0
    %v566 = vadd.f32 0.0, %v565
    %v567 = vpop.f32.mrb[0].mxu0
    %v568 = vpop.f32.mrb[0].mxu0
    %v569 = vpop.f32.mrb[0].mxu0
    %570 = vdwg.mxu0
    %v571 = vadd.f32 %v523, %v566
    %v572 = vmul.f32 %v571, 0.5
    %v573 = vtanh.pop %v572
    %v574 = vmul.f32 %v573, 0.5
    %v575 = vadd.f32 %v574, 0.5
    %v576 = vtanh.pop %v571
    %v577 = vmul.f32 %v575, %v441
    %579 = vrot.lane.b32.xlu0 %v576, 96
    %v580 = vpop.permute.xlu0 %579
    %v582 = vmul.f32 %v575, %v580
    %584 = vrot.lane.b32.xlu0 %v582, 16
    %v585 = vpop.permute.xlu0 %584
    %v587 = vadd.f32 %v577, %v585
    %v588 = vtanh.pop %v587
    %590 = vrot.lane.b32.xlu0 %v588, 32
    %v591 = vpop.permute.xlu0 %590
    %v593 = vmul.f32 %v575, %v591
    %s594 = scalar_lea.vmem %s34, 4
    %v595 = vld [vmem:[%s594] sm:$0x1]
    %v596 = vunpack.c.l.bf16 %v595
    %v597 = vpack.c.bf16 %v520, %v520
    %599 = vrot.lane.b32.xlu0 %v597, 80
    %v600 = vpop.permute.xlu0 %599
    %v602 = vsel %vm64, %v600, 0
    %604 = vmatprep.subr.bf16.mxu0 0
    %605 = vmatpush1.bf16.msra.mxu0 %v150
    %606 = vmatprep.subr.bf16.mxu0 0
    %607 = vmatpush1.bf16.msra.mxu0 0
    %608 = vmatprep.subr.bf16.mxu0 0
    %609 = vmatpush1.bf16.msra.mxu0 0
    %610 = vmatprep.subr.bf16.mxu0 0
    %611 = vmatpush1.bf16.msra.mxu0 0
    %612 = vmatprep.subr.bf16.mxu0 0
    %613 = vmatpush1.bf16.msra.mxu0 0
    %614 = vmatprep.subr.bf16.mxu0 0
    %615 = vmatpush1.bf16.msra.mxu0 0
    %616 = vmatprep.subr.bf16.mxu0 0
    %617 = vmatpush1.bf16.msra.mxu0 0
    %618 = vmatprep.subr.bf16.mxu0 0
    %619 = vmatpush1.bf16.msra.mxu0 0
    %620 = vmatprep.subr.bf16.mxu0 0
    %621 = vmatpush1.bf16.msra.mxu0 0
    %622 = vmatprep.subr.bf16.mxu0 0
    %623 = vmatpush1.bf16.msra.mxu0 0
    %624 = vmatprep.subr.bf16.mxu0 0
    %625 = vmatpush1.bf16.msra.mxu0 0
    %626 = vmatprep.subr.bf16.mxu0 0
    %627 = vmatpush1.bf16.msra.mxu0 0
    %628 = vmatprep.subr.bf16.mxu0 0
    %629 = vmatpush1.bf16.msra.mxu0 0
    %630 = vmatprep.subr.bf16.mxu0 0
    %631 = vmatpush1.bf16.msra.mxu0 0
    %632 = vmatprep.subr.bf16.mxu0 0
    %633 = vmatpush1.bf16.msra.mxu0 0
    %634 = vmatprep.subr.bf16.mxu0 0
    %635 = vmatpush1.bf16.msra.mxu0 0
    %636 = vmatprep.mubr.bf16.mxu0 0
    %637 = vmatmul.mubr.bf16.gmra.mrb[0].mxu0 %v602
    %v638 = vpop.f32.mrb[0].mxu0
    %v639 = vadd.f32 0.0, %v638
    %v640 = vpop.f32.mrb[0].mxu0
    %v641 = vpop.f32.mrb[0].mxu0
    %v642 = vpop.f32.mrb[0].mxu0
    %643 = vdwg.mxu0
    %v644 = vadd.f32 %v596, %v639
    %v645 = vmul.f32 %v644, 0.5
    %v646 = vtanh.pop %v645
    %v647 = vmul.f32 %v646, 0.5
    %v648 = vadd.f32 %v647, 0.5
    %v649 = vtanh.pop %v644
    %v650 = vmul.f32 %v648, %v514
    %652 = vrot.lane.b32.xlu0 %v649, 96
    %v653 = vpop.permute.xlu0 %652
    %v655 = vmul.f32 %v648, %v653
    %657 = vrot.lane.b32.xlu0 %v655, 16
    %v658 = vpop.permute.xlu0 %657
    %v660 = vadd.f32 %v650, %v658
    %v661 = vtanh.pop %v660
    %663 = vrot.lane.b32.xlu0 %v661, 32
    %v664 = vpop.permute.xlu0 %663
    %v666 = vmul.f32 %v648, %v664
    %s667 = scalar_lea.vmem %s0, 4
    %v668 = vld [vmem:[%s667] sm:$0x1]
    %v669 = vunpack.c.l.bf16 %v668
    %v670 = vpack.c.bf16 %v593, %v593
    %672 = vrot.lane.b32.xlu0 %v670, 80
    %v673 = vpop.permute.xlu0 %672
    %v675 = vsel %vm64, %v673, 0
    %677 = vmatprep.subr.bf16.mxu0 0
    %678 = vmatpush1.bf16.msra.mxu0 %v62
    %679 = vmatprep.subr.bf16.mxu0 0
    %680 = vmatpush1.bf16.msra.mxu0 0
    %681 = vmatprep.subr.bf16.mxu0 0
    %682 = vmatpush1.bf16.msra.mxu0 0
    %683 = vmatprep.subr.bf16.mxu0 0
    %684 = vmatpush1.bf16.msra.mxu0 0
    %685 = vmatprep.subr.bf16.mxu0 0
    %686 = vmatpush1.bf16.msra.mxu0 0
    %687 = vmatprep.subr.bf16.mxu0 0
    %688 = vmatpush1.bf16.msra.mxu0 0
    %689 = vmatprep.subr.bf16.mxu0 0
    %690 = vmatpush1.bf16.msra.mxu0 0
    %691 = vmatprep.subr.bf16.mxu0 0
    %692 = vmatpush1.bf16.msra.mxu0 0
    %693 = vmatprep.subr.bf16.mxu0 0
    %694 = vmatpush1.bf16.msra.mxu0 0
    %695 = vmatprep.subr.bf16.mxu0 0
    %696 = vmatpush1.bf16.msra.mxu0 0
    %697 = vmatprep.subr.bf16.mxu0 0
    %698 = vmatpush1.bf16.msra.mxu0 0
    %699 = vmatprep.subr.bf16.mxu0 0
    %700 = vmatpush1.bf16.msra.mxu0 0
    %701 = vmatprep.subr.bf16.mxu0 0
    %702 = vmatpush1.bf16.msra.mxu0 0
    %703 = vmatprep.subr.bf16.mxu0 0
    %704 = vmatpush1.bf16.msra.mxu0 0
    %705 = vmatprep.subr.bf16.mxu0 0
    %706 = vmatpush1.bf16.msra.mxu0 0
    %707 = vmatprep.subr.bf16.mxu0 0
    %708 = vmatpush1.bf16.msra.mxu0 0
    %709 = vmatprep.mubr.bf16.mxu0 0
    %710 = vmatmul.mubr.bf16.gmra.mrb[0].mxu0 %v675
    %v711 = vpop.f32.mrb[0].mxu0
    %v712 = vadd.f32 0.0, %v711
    %v713 = vpop.f32.mrb[0].mxu0
    %v714 = vpop.f32.mrb[0].mxu0
    %v715 = vpop.f32.mrb[0].mxu0
    %716 = vdwg.mxu0
    %v717 = vadd.f32 %v669, %v712
    %v718 = vmul.f32 %v717, 0.5
    %v719 = vtanh.pop %v718
    %v720 = vmul.f32 %v719, 0.5
    %v721 = vadd.f32 %v720, 0.5
    %v722 = vtanh.pop %v717
    %v723 = vmul.f32 %v721, %v587
    %725 = vrot.lane.b32.xlu0 %v722, 96
    %v726 = vpop.permute.xlu0 %725
    %v728 = vmul.f32 %v721, %v726
    %730 = vrot.lane.b32.xlu0 %v728, 16
    %v731 = vpop.permute.xlu0 %730
    %v733 = vadd.f32 %v723, %v731
    %v734 = vtanh.pop %v733
    %736 = vrot.lane.b32.xlu0 %v734, 32
    %v737 = vpop.permute.xlu0 %736
    %v739 = vmul.f32 %v721, %v737
    %s740 = scalar_lea.vmem %s34, 3
    %v741 = vld [vmem:[%s740] sm:$0x1]
    %v742 = vunpack.c.l.bf16 %v741
    %v743 = vpack.c.bf16 %v666, %v666
    %745 = vrot.lane.b32.xlu0 %v743, 80
    %v746 = vpop.permute.xlu0 %745
    %v748 = vsel %vm64, %v746, 0
    %750 = vmatprep.subr.bf16.mxu0 0
    %751 = vmatpush1.bf16.msra.mxu0 %v150
    %752 = vmatprep.subr.bf16.mxu0 0
    %753 = vmatpush1.bf16.msra.mxu0 0
    %754 = vmatprep.subr.bf16.mxu0 0
    %755 = vmatpush1.bf16.msra.mxu0 0
    %756 = vmatprep.subr.bf16.mxu0 0
    %757 = vmatpush1.bf16.msra.mxu0 0
    %758 = vmatprep.subr.bf16.mxu0 0
    %759 = vmatpush1.bf16.msra.mxu0 0
    %760 = vmatprep.subr.bf16.mxu0 0
    %761 = vmatpush1.bf16.msra.mxu0 0
    %762 = vmatprep.subr.bf16.mxu0 0
    %763 = vmatpush1.bf16.msra.mxu0 0
    %764 = vmatprep.subr.bf16.mxu0 0
    %765 = vmatpush1.bf16.msra.mxu0 0
    %766 = vmatprep.subr.bf16.mxu0 0
    %767 = vmatpush1.bf16.msra.mxu0 0
    %768 = vmatprep.subr.bf16.mxu0 0
    %769 = vmatpush1.bf16.msra.mxu0 0
    %770 = vmatprep.subr.bf16.mxu0 0
    %771 = vmatpush1.bf16.msra.mxu0 0
    %772 = vmatprep.subr.bf16.mxu0 0
    %773 = vmatpush1.bf16.msra.mxu0 0
    %774 = vmatprep.subr.bf16.mxu0 0
    %775 = vmatpush1.bf16.msra.mxu0 0
    %776 = vmatprep.subr.bf16.mxu0 0
    %777 = vmatpush1.bf16.msra.mxu0 0
    %778 = vmatprep.subr.bf16.mxu0 0
    %779 = vmatpush1.bf16.msra.mxu0 0
    %780 = vmatprep.subr.bf16.mxu0 0
    %781 = vmatpush1.bf16.msra.mxu0 0
    %782 = vmatprep.mubr.bf16.mxu0 0
    %783 = vmatmul.mubr.bf16.gmra.mrb[0].mxu0 %v748
    %v784 = vpop.f32.mrb[0].mxu0
    %v785 = vadd.f32 0.0, %v784
    %v786 = vpop.f32.mrb[0].mxu0
    %v787 = vpop.f32.mrb[0].mxu0
    %v788 = vpop.f32.mrb[0].mxu0
    %789 = vdwg.mxu0
    %v790 = vadd.f32 %v742, %v785
    %v791 = vmul.f32 %v790, 0.5
    %v792 = vtanh.pop %v791
    %v793 = vmul.f32 %v792, 0.5
    %v794 = vadd.f32 %v793, 0.5
    %v795 = vtanh.pop %v790
    %v796 = vmul.f32 %v794, %v660
    %798 = vrot.lane.b32.xlu0 %v795, 96
    %v799 = vpop.permute.xlu0 %798
    %v801 = vmul.f32 %v794, %v799
    %803 = vrot.lane.b32.xlu0 %v801, 16
    %v804 = vpop.permute.xlu0 %803
    %v806 = vadd.f32 %v796, %v804
    %v807 = vtanh.pop %v806
    %809 = vrot.lane.b32.xlu0 %v807, 32
    %v810 = vpop.permute.xlu0 %809
    %v812 = vmul.f32 %v794, %v810
    %s813 = scalar_lea.vmem %s0, 5
    %v814 = vld [vmem:[%s813] sm:$0x1]
    %v815 = vunpack.c.l.bf16 %v814
    %v816 = vpack.c.bf16 %v739, %v739
    %818 = vrot.lane.b32.xlu0 %v816, 80
    %v819 = vpop.permute.xlu0 %818
    %v821 = vsel %vm64, %v819, 0
    %823 = vmatprep.subr.bf16.mxu0 0
    %824 = vmatpush1.bf16.msra.mxu0 %v62
    %825 = vmatprep.subr.bf16.mxu0 0
    %826 = vmatpush1.bf16.msra.mxu0 0
    %827 = vmatprep.subr.bf16.mxu0 0
    %828 = vmatpush1.bf16.msra.mxu0 0
    %829 = vmatprep.subr.bf16.mxu0 0
    %830 = vmatpush1.bf16.msra.mxu0 0
    %831 = vmatprep.subr.bf16.mxu0 0
    %832 = vmatpush1.bf16.msra.mxu0 0
    %833 = vmatprep.subr.bf16.mxu0 0
    %834 = vmatpush1.bf16.msra.mxu0 0
    %835 = vmatprep.subr.bf16.mxu0 0
    %836 = vmatpush1.bf16.msra.mxu0 0
    %837 = vmatprep.subr.bf16.mxu0 0
    %838 = vmatpush1.bf16.msra.mxu0 0
    %839 = vmatprep.subr.bf16.mxu0 0
    %840 = vmatpush1.bf16.msra.mxu0 0
    %841 = vmatprep.subr.bf16.mxu0 0
    %842 = vmatpush1.bf16.msra.mxu0 0
    %843 = vmatprep.subr.bf16.mxu0 0
    %844 = vmatpush1.bf16.msra.mxu0 0
    %845 = vmatprep.subr.bf16.mxu0 0
    %846 = vmatpush1.bf16.msra.mxu0 0
    %847 = vmatprep.subr.bf16.mxu0 0
    %848 = vmatpush1.bf16.msra.mxu0 0
    %849 = vmatprep.subr.bf16.mxu0 0
    %850 = vmatpush1.bf16.msra.mxu0 0
    %851 = vmatprep.subr.bf16.mxu0 0
    %852 = vmatpush1.bf16.msra.mxu0 0
    %853 = vmatprep.subr.bf16.mxu0 0
    %854 = vmatpush1.bf16.msra.mxu0 0
    %855 = vmatprep.mubr.bf16.mxu0 0
    %856 = vmatmul.mubr.bf16.gmra.mrb[0].mxu0 %v821
    %v857 = vpop.f32.mrb[0].mxu0
    %v858 = vadd.f32 0.0, %v857
    %v859 = vpop.f32.mrb[0].mxu0
    %v860 = vpop.f32.mrb[0].mxu0
    %v861 = vpop.f32.mrb[0].mxu0
    %862 = vdwg.mxu0
    %v863 = vadd.f32 %v815, %v858
    %v864 = vmul.f32 %v863, 0.5
    %v865 = vtanh.pop %v864
    %v866 = vmul.f32 %v865, 0.5
    %v867 = vadd.f32 %v866, 0.5
    %v868 = vtanh.pop %v863
    %v869 = vmul.f32 %v867, %v733
    %871 = vrot.lane.b32.xlu0 %v868, 96
    %v872 = vpop.permute.xlu0 %871
    %v874 = vmul.f32 %v867, %v872
    %876 = vrot.lane.b32.xlu0 %v874, 16
    %v877 = vpop.permute.xlu0 %876
    %v879 = vadd.f32 %v869, %v877
    %v880 = vtanh.pop %v879
    %882 = vrot.lane.b32.xlu0 %v880, 32
    %v883 = vpop.permute.xlu0 %882
    %v885 = vmul.f32 %v867, %v883
    %s886 = scalar_lea.vmem %s34, 2
    %v887 = vld [vmem:[%s886] sm:$0x1]
    %v888 = vunpack.c.l.bf16 %v887
    %v889 = vpack.c.bf16 %v812, %v812
    %891 = vrot.lane.b32.xlu0 %v889, 80
    %v892 = vpop.permute.xlu0 %891
    %v894 = vsel %vm64, %v892, 0
    %896 = vmatprep.subr.bf16.mxu0 0
    %897 = vmatpush1.bf16.msra.mxu0 %v150
    %898 = vmatprep.subr.bf16.mxu0 0
    %899 = vmatpush1.bf16.msra.mxu0 0
    %900 = vmatprep.subr.bf16.mxu0 0
    %901 = vmatpush1.bf16.msra.mxu0 0
    %902 = vmatprep.subr.bf16.mxu0 0
    %903 = vmatpush1.bf16.msra.mxu0 0
    %904 = vmatprep.subr.bf16.mxu0 0
    %905 = vmatpush1.bf16.msra.mxu0 0
    %906 = vmatprep.subr.bf16.mxu0 0
    %907 = vmatpush1.bf16.msra.mxu0 0
    %908 = vmatprep.subr.bf16.mxu0 0
    %909 = vmatpush1.bf16.msra.mxu0 0
    %910 = vmatprep.subr.bf16.mxu0 0
    %911 = vmatpush1.bf16.msra.mxu0 0
    %912 = vmatprep.subr.bf16.mxu0 0
    %913 = vmatpush1.bf16.msra.mxu0 0
    %914 = vmatprep.subr.bf16.mxu0 0
    %915 = vmatpush1.bf16.msra.mxu0 0
    %916 = vmatprep.subr.bf16.mxu0 0
    %917 = vmatpush1.bf16.msra.mxu0 0
    %918 = vmatprep.subr.bf16.mxu0 0
    %919 = vmatpush1.bf16.msra.mxu0 0
    %920 = vmatprep.subr.bf16.mxu0 0
    %921 = vmatpush1.bf16.msra.mxu0 0
    %922 = vmatprep.subr.bf16.mxu0 0
    %923 = vmatpush1.bf16.msra.mxu0 0
    %924 = vmatprep.subr.bf16.mxu0 0
    %925 = vmatpush1.bf16.msra.mxu0 0
    %926 = vmatprep.subr.bf16.mxu0 0
    %927 = vmatpush1.bf16.msra.mxu0 0
    %928 = vmatprep.mubr.bf16.mxu0 0
    %929 = vmatmul.mubr.bf16.gmra.mrb[0].mxu0 %v894
    %v930 = vpop.f32.mrb[0].mxu0
    %v931 = vadd.f32 0.0, %v930
    %v932 = vpop.f32.mrb[0].mxu0
    %v933 = vpop.f32.mrb[0].mxu0
    %v934 = vpop.f32.mrb[0].mxu0
    %935 = vdwg.mxu0
    %v936 = vadd.f32 %v888, %v931
    %v937 = vmul.f32 %v936, 0.5
    %v938 = vtanh.pop %v937
    %v939 = vmul.f32 %v938, 0.5
    %v940 = vadd.f32 %v939, 0.5
    %v941 = vtanh.pop %v936
    %v942 = vmul.f32 %v940, %v806
    %944 = vrot.lane.b32.xlu0 %v941, 96
    %v945 = vpop.permute.xlu0 %944
    %v947 = vmul.f32 %v940, %v945
    %949 = vrot.lane.b32.xlu0 %v947, 16
    %v950 = vpop.permute.xlu0 %949
    %v952 = vadd.f32 %v942, %v950
    %v953 = vtanh.pop %v952
    %955 = vrot.lane.b32.xlu0 %v953, 32
    %v956 = vpop.permute.xlu0 %955
    %v958 = vmul.f32 %v940, %v956
    %s959 = scalar_lea.vmem %s0, 6
    %v960 = vld [vmem:[%s959] sm:$0x1]
    %v961 = vunpack.c.l.bf16 %v960
    %v962 = vpack.c.bf16 %v885, %v885
    %964 = vrot.lane.b32.xlu0 %v962, 80
    %v965 = vpop.permute.xlu0 %964
    %v967 = vsel %vm64, %v965, 0
    %969 = vmatprep.subr.bf16.mxu0 0
    %970 = vmatpush1.bf16.msra.mxu0 %v62
    %971 = vmatprep.subr.bf16.mxu0 0
    %972 = vmatpush1.bf16.msra.mxu0 0
    %973 = vmatprep.subr.bf16.mxu0 0
    %974 = vmatpush1.bf16.msra.mxu0 0
    %975 = vmatprep.subr.bf16.mxu0 0
    %976 = vmatpush1.bf16.msra.mxu0 0
    %977 = vmatprep.subr.bf16.mxu0 0
    %978 = vmatpush1.bf16.msra.mxu0 0
    %979 = vmatprep.subr.bf16.mxu0 0
    %980 = vmatpush1.bf16.msra.mxu0 0
    %981 = vmatprep.subr.bf16.mxu0 0
    %982 = vmatpush1.bf16.msra.mxu0 0
    %983 = vmatprep.subr.bf16.mxu0 0
    %984 = vmatpush1.bf16.msra.mxu0 0
    %985 = vmatprep.subr.bf16.mxu0 0
    %986 = vmatpush1.bf16.msra.mxu0 0
    %987 = vmatprep.subr.bf16.mxu0 0
    %988 = vmatpush1.bf16.msra.mxu0 0
    %989 = vmatprep.subr.bf16.mxu0 0
    %990 = vmatpush1.bf16.msra.mxu0 0
    %991 = vmatprep.subr.bf16.mxu0 0
    %992 = vmatpush1.bf16.msra.mxu0 0
    %993 = vmatprep.subr.bf16.mxu0 0
    %994 = vmatpush1.bf16.msra.mxu0 0
    %995 = vmatprep.subr.bf16.mxu0 0
    %996 = vmatpush1.bf16.msra.mxu0 0
    %997 = vmatprep.subr.bf16.mxu0 0
    %998 = vmatpush1.bf16.msra.mxu0 0
    %999 = vmatprep.subr.bf16.mxu0 0
    %1000 = vmatpush1.bf16.msra.mxu0 0
    %1001 = vmatprep.mubr.bf16.mxu0 0
    %1002 = vmatmul.mubr.bf16.gmra.mrb[0].mxu0 %v967
    %v1003 = vpop.f32.mrb[0].mxu0
    %v1004 = vadd.f32 0.0, %v1003
    %v1005 = vpop.f32.mrb[0].mxu0
    %v1006 = vpop.f32.mrb[0].mxu0
    %v1007 = vpop.f32.mrb[0].mxu0
    %1008 = vdwg.mxu0
    %v1009 = vadd.f32 %v961, %v1004
    %v1010 = vmul.f32 %v1009, 0.5
    %v1011 = vtanh.pop %v1010
    %v1012 = vmul.f32 %v1011, 0.5
    %v1013 = vadd.f32 %v1012, 0.5
    %v1014 = vtanh.pop %v1009
    %v1015 = vmul.f32 %v1013, %v879
    %1017 = vrot.lane.b32.xlu0 %v1014, 96
    %v1018 = vpop.permute.xlu0 %1017
    %v1020 = vmul.f32 %v1013, %v1018
    %1022 = vrot.lane.b32.xlu0 %v1020, 16
    %v1023 = vpop.permute.xlu0 %1022
    %v1025 = vadd.f32 %v1015, %v1023
    %v1026 = vtanh.pop %v1025
    %1028 = vrot.lane.b32.xlu0 %v1026, 32
    %v1029 = vpop.permute.xlu0 %1028
    %v1031 = vmul.f32 %v1013, %v1029
    %s1032 = scalar_lea.vmem %s34, 1
    %v1033 = vld [vmem:[%s1032] sm:$0x1]
    %v1034 = vunpack.c.l.bf16 %v1033
    %v1035 = vpack.c.bf16 %v958, %v958
    %1037 = vrot.lane.b32.xlu0 %v1035, 80
    %v1038 = vpop.permute.xlu0 %1037
    %v1040 = vsel %vm64, %v1038, 0
    %1042 = vmatprep.subr.bf16.mxu0 0
    %1043 = vmatpush1.bf16.msra.mxu0 %v150
    %1044 = vmatprep.subr.bf16.mxu0 0
    %1045 = vmatpush1.bf16.msra.mxu0 0
    %1046 = vmatprep.subr.bf16.mxu0 0
    %1047 = vmatpush1.bf16.msra.mxu0 0
    %1048 = vmatprep.subr.bf16.mxu0 0
    %1049 = vmatpush1.bf16.msra.mxu0 0
    %1050 = vmatprep.subr.bf16.mxu0 0
    %1051 = vmatpush1.bf16.msra.mxu0 0
    %1052 = vmatprep.subr.bf16.mxu0 0
    %1053 = vmatpush1.bf16.msra.mxu0 0
    %1054 = vmatprep.subr.bf16.mxu0 0
    %1055 = vmatpush1.bf16.msra.mxu0 0
    %1056 = vmatprep.subr.bf16.mxu0 0
    %1057 = vmatpush1.bf16.msra.mxu0 0
    %1058 = vmatprep.subr.bf16.mxu0 0
    %1059 = vmatpush1.bf16.msra.mxu0 0
    %1060 = vmatprep.subr.bf16.mxu0 0
    %1061 = vmatpush1.bf16.msra.mxu0 0
    %1062 = vmatprep.subr.bf16.mxu0 0
    %1063 = vmatpush1.bf16.msra.mxu0 0
    %1064 = vmatprep.subr.bf16.mxu0 0
    %1065 = vmatpush1.bf16.msra.mxu0 0
    %1066 = vmatprep.subr.bf16.mxu0 0
    %1067 = vmatpush1.bf16.msra.mxu0 0
    %1068 = vmatprep.subr.bf16.mxu0 0
    %1069 = vmatpush1.bf16.msra.mxu0 0
    %1070 = vmatprep.subr.bf16.mxu0 0
    %1071 = vmatpush1.bf16.msra.mxu0 0
    %1072 = vmatprep.subr.bf16.mxu0 0
    %1073 = vmatpush1.bf16.msra.mxu0 0
    %1074 = vmatprep.mubr.bf16.mxu0 0
    %1075 = vmatmul.mubr.bf16.gmra.mrb[0].mxu0 %v1040
    %v1076 = vpop.f32.mrb[0].mxu0
    %v1077 = vadd.f32 0.0, %v1076
    %v1078 = vpop.f32.mrb[0].mxu0
    %v1079 = vpop.f32.mrb[0].mxu0
    %v1080 = vpop.f32.mrb[0].mxu0
    %1081 = vdwg.mxu0
    %v1082 = vadd.f32 %v1034, %v1077
    %v1083 = vmul.f32 %v1082, 0.5
    %v1084 = vtanh.pop %v1083
    %v1085 = vmul.f32 %v1084, 0.5
    %v1086 = vadd.f32 %v1085, 0.5
    %v1087 = vtanh.pop %v1082
    %v1088 = vmul.f32 %v1086, %v952
    %1090 = vrot.lane.b32.xlu0 %v1087, 96
    %v1091 = vpop.permute.xlu0 %1090
    %v1093 = vmul.f32 %v1086, %v1091
    %1095 = vrot.lane.b32.xlu0 %v1093, 16
    %v1096 = vpop.permute.xlu0 %1095
    %v1098 = vadd.f32 %v1088, %v1096
    %v1099 = vtanh.pop %v1098
    %1101 = vrot.lane.b32.xlu0 %v1099, 32
    %v1102 = vpop.permute.xlu0 %1101
    %v1104 = vmul.f32 %v1086, %v1102
    %s1105 = scalar_lea.vmem %s0, 7
    %v1106 = vld [vmem:[%s1105] sm:$0x1]
    %v1107 = vunpack.c.l.bf16 %v1106
    %v1108 = vpack.c.bf16 %v1031, %v1031
    %1110 = vrot.lane.b32.xlu0 %v1108, 80
    %v1111 = vpop.permute.xlu0 %1110
    %v1113 = vsel %vm64, %v1111, 0
    %1115 = vmatprep.subr.bf16.mxu0 0
    %1116 = vmatpush1.bf16.msra.mxu0 %v62
    %1117 = vmatprep.subr.bf16.mxu0 0
    %1118 = vmatpush1.bf16.msra.mxu0 0
    %1119 = vmatprep.subr.bf16.mxu0 0
    %1120 = vmatpush1.bf16.msra.mxu0 0
    %1121 = vmatprep.subr.bf16.mxu0 0
    %1122 = vmatpush1.bf16.msra.mxu0 0
    %1123 = vmatprep.subr.bf16.mxu0 0
    %1124 = vmatpush1.bf16.msra.mxu0 0
    %1125 = vmatprep.subr.bf16.mxu0 0
    %1126 = vmatpush1.bf16.msra.mxu0 0
    %1127 = vmatprep.subr.bf16.mxu0 0
    %1128 = vmatpush1.bf16.msra.mxu0 0
    %1129 = vmatprep.subr.bf16.mxu0 0
    %1130 = vmatpush1.bf16.msra.mxu0 0
    %1131 = vmatprep.subr.bf16.mxu0 0
    %1132 = vmatpush1.bf16.msra.mxu0 0
    %1133 = vmatprep.subr.bf16.mxu0 0
    %1134 = vmatpush1.bf16.msra.mxu0 0
    %1135 = vmatprep.subr.bf16.mxu0 0
    %1136 = vmatpush1.bf16.msra.mxu0 0
    %1137 = vmatprep.subr.bf16.mxu0 0
    %1138 = vmatpush1.bf16.msra.mxu0 0
    %1139 = vmatprep.subr.bf16.mxu0 0
    %1140 = vmatpush1.bf16.msra.mxu0 0
    %1141 = vmatprep.subr.bf16.mxu0 0
    %1142 = vmatpush1.bf16.msra.mxu0 0
    %1143 = vmatprep.subr.bf16.mxu0 0
    %1144 = vmatpush1.bf16.msra.mxu0 0
    %1145 = vmatprep.subr.bf16.mxu0 0
    %1146 = vmatpush1.bf16.msra.mxu0 0
    %1147 = vmatprep.mubr.bf16.mxu0 0
    %1148 = vmatmul.mubr.bf16.gmra.mrb[0].mxu0 %v1113
    %v1149 = vpop.f32.mrb[0].mxu0
    %v1150 = vadd.f32 0.0, %v1149
    %v1151 = vpop.f32.mrb[0].mxu0
    %v1152 = vpop.f32.mrb[0].mxu0
    %v1153 = vpop.f32.mrb[0].mxu0
    %1154 = vdwg.mxu0
    %v1155 = vadd.f32 %v1107, %v1150
    %v1156 = vmul.f32 %v1155, 0.5
    %v1157 = vtanh.pop %v1156
    %v1158 = vmul.f32 %v1157, 0.5
    %v1159 = vadd.f32 %v1158, 0.5
    %v1160 = vtanh.pop %v1155
    %v1161 = vmul.f32 %v1159, %v1025
    %1163 = vrot.lane.b32.xlu0 %v1160, 96
    %v1164 = vpop.permute.xlu0 %1163
    %v1166 = vmul.f32 %v1159, %v1164
    %1168 = vrot.lane.b32.xlu0 %v1166, 16
    %v1169 = vpop.permute.xlu0 %1168
    %v1171 = vadd.f32 %v1161, %v1169
    %v1172 = vtanh.pop %v1171
    %1174 = vrot.lane.b32.xlu0 %v1172, 32
    %v1175 = vpop.permute.xlu0 %1174
    %v1177 = vmul.f32 %v1159, %v1175
    %v1178 = vld [vmem:[%s34] sm:$0x1]
    %v1179 = vunpack.c.l.bf16 %v1178
    %v1180 = vpack.c.bf16 %v1104, %v1104
    %1182 = vrot.lane.b32.xlu0 %v1180, 80
    %v1183 = vpop.permute.xlu0 %1182
    %v1185 = vsel %vm64, %v1183, 0
    %1187 = vmatprep.subr.bf16.mxu0 0
    %1188 = vmatpush1.bf16.msra.mxu0 %v150
    %1189 = vmatprep.subr.bf16.mxu0 0
    %1190 = vmatpush1.bf16.msra.mxu0 0
    %1191 = vmatprep.subr.bf16.mxu0 0
    %1192 = vmatpush1.bf16.msra.mxu0 0
    %1193 = vmatprep.subr.bf16.mxu0 0
    %1194 = vmatpush1.bf16.msra.mxu0 0
    %1195 = vmatprep.subr.bf16.mxu0 0
    %1196 = vmatpush1.bf16.msra.mxu0 0
    %1197 = vmatprep.subr.bf16.mxu0 0
    %1198 = vmatpush1.bf16.msra.mxu0 0
    %1199 = vmatprep.subr.bf16.mxu0 0
    %1200 = vmatpush1.bf16.msra.mxu0 0
    %1201 = vmatprep.subr.bf16.mxu0 0
    %1202 = vmatpush1.bf16.msra.mxu0 0
    %1203 = vmatprep.subr.bf16.mxu0 0
    %1204 = vmatpush1.bf16.msra.mxu0 0
    %1205 = vmatprep.subr.bf16.mxu0 0
    %1206 = vmatpush1.bf16.msra.mxu0 0
    %1207 = vmatprep.subr.bf16.mxu0 0
    %1208 = vmatpush1.bf16.msra.mxu0 0
    %1209 = vmatprep.subr.bf16.mxu0 0
    %1210 = vmatpush1.bf16.msra.mxu0 0
    %1211 = vmatprep.subr.bf16.mxu0 0
    %1212 = vmatpush1.bf16.msra.mxu0 0
    %1213 = vmatprep.subr.bf16.mxu0 0
    %1214 = vmatpush1.bf16.msra.mxu0 0
    %1215 = vmatprep.subr.bf16.mxu0 0
    %1216 = vmatpush1.bf16.msra.mxu0 0
    %1217 = vmatprep.subr.bf16.mxu0 0
    %1218 = vmatpush1.bf16.msra.mxu0 0
    %1219 = vmatprep.mubr.bf16.mxu0 0
    %1220 = vmatmul.mubr.bf16.gmra.mrb[0].mxu0 %v1185
    %v1221 = vpop.f32.mrb[0].mxu0
    %v1222 = vadd.f32 0.0, %v1221
    %v1223 = vpop.f32.mrb[0].mxu0
    %v1224 = vpop.f32.mrb[0].mxu0
    %v1225 = vpop.f32.mrb[0].mxu0
    %1226 = vdwg.mxu0
    %v1227 = vadd.f32 %v1179, %v1222
    %v1228 = vmul.f32 %v1227, 0.5
    %v1229 = vtanh.pop %v1228
    %v1230 = vmul.f32 %v1229, 0.5
    %v1231 = vadd.f32 %v1230, 0.5
    %v1232 = vtanh.pop %v1227
    %v1233 = vmul.f32 %v1231, %v1098
    %1235 = vrot.lane.b32.xlu0 %v1232, 96
    %v1236 = vpop.permute.xlu0 %1235
    %v1238 = vmul.f32 %v1231, %v1236
    %1240 = vrot.lane.b32.xlu0 %v1238, 16
    %v1241 = vpop.permute.xlu0 %1240
    %v1243 = vadd.f32 %v1233, %v1241
    %v1244 = vtanh.pop %v1243
    %1246 = vrot.lane.b32.xlu0 %v1244, 32
    %v1247 = vpop.permute.xlu0 %1246
    %v1249 = vmul.f32 %v1231, %v1247
    %v1252 = vunpack.c.l.s4 1983009808
    %v1253 = vunpack.c.0.s8 %v1252
    %v1254 = vlaneseq
    %v1255 = vshrl.u32 %v1254, 7
    %v1256 = vsub.s32 %v1253, %v1255
    %v1257 = vrot.slane %v1177, %v1256
    %1258 = vrot.lane.b32.xlu0 %v1257, 80
    %v1259 = vpop.permute.xlu0 %1258
    %vm1261 = vcmask 123904
    %1262 = vst.msk [vmem:[#allocation2] sm:$0x3] %vm1261, %v1259
    %v1265 = vunpack.c.l.s4 1983009808
    %v1266 = vunpack.c.0.s8 %v1265
    %v1267 = vlaneseq
    %v1268 = vshrl.u32 %v1267, 7
    %v1269 = vsub.s32 %v1266, %v1268
    %v1270 = vrot.slane %v1171, %v1269
    %1271 = vrot.lane.b32.xlu0 %v1270, 112
    %v1272 = vpop.permute.xlu0 %1271
    %1274 = vst.msk [vmem:[#allocation3] sm:$0x3] %vm1261, %v1272
    %v1277 = vunpack.c.l.s4 1983009808
    %v1278 = vunpack.c.0.s8 %v1277
    %v1279 = vlaneseq
    %v1280 = vshrl.u32 %v1279, 7
    %v1281 = vsub.s32 %v1278, %v1280
    %v1282 = vrot.slane %v1249, %v1281
    %1283 = vrot.lane.b32.xlu0 %v1282, 80
    %v1284 = vpop.permute.xlu0 %1283
    %1286 = vst.msk [vmem:[#allocation4] sm:$0x3] %vm1261, %v1284
    %v1289 = vunpack.c.l.s4 1983009808
    %v1290 = vunpack.c.0.s8 %v1289
    %v1291 = vlaneseq
    %v1292 = vshrl.u32 %v1291, 7
    %v1293 = vsub.s32 %v1290, %v1292
    %v1294 = vrot.slane %v1243, %v1293
    %1295 = vrot.lane.b32.xlu0 %v1294, 112
    %v1296 = vpop.permute.xlu0 %1295
    %1298 = vst.msk [vmem:[#allocation5] sm:$0x3] %vm1261, %v1296
    // Predicated region
    $region22: #{bilstm_encoder_pallas.3} parent=1 // pred_check
      %p1299 = pneg %p38
    $region23: #{bilstm_encoder_pallas.3} parent=1 // pred_check_branch
      %1301 = sbr.rel (%p1299) target = $region25
    $region24: #{bilstm_encoder_pallas.3} parent=1 // pred_region
      %1302 = vrot.lane.b32.xlu0 %v1282, 96
      %v1303 = vpop.permute.xlu0 %1302
      %v1305 = vsel %vm64, %v1259, %v1303
      %vm1306 = vcmask 254976
      %1307 = vst.msk [vmem:[#allocation6] sm:$0x3] %vm1306, %v1305
    $region25: #{bilstm_encoder_pallas.3} parent=1 // pred_fallthru
      _
    // Predicated region
    $region26: #{bilstm_encoder_pallas.3} parent=1 // pred_check
      _
    $region27: #{bilstm_encoder_pallas.3} parent=1 // pred_check_branch
      %1309 = sbr.rel (0) target = $region29
    $region28: #{bilstm_encoder_pallas.3} parent=1 // pred_region
      %s1311 = ssub.s32 32, 32
      %1312 = vsyncadd [#allocation7], %s1311
      %s1314 = sshll.u32 [#allocation6], 4
      %s1315 = int_to_ptr.vmem [resolvable:$true] %s1314
      %1317 = dma.vmem_to_hbm [thread:$0]  %s1315, 32, %s4, [#allocation7]
    $region29: #{bilstm_encoder_pallas.3} parent=1 // pred_fallthru
      _
    // Predicated region
    $region30: #{bilstm_encoder_pallas.3} parent=1 // pred_check
      _
    $region31: #{bilstm_encoder_pallas.3} parent=1 // pred_check_branch
      %1319 = sbr.rel (0) target = $region33
    $region32: #{bilstm_encoder_pallas.3} parent=1 // pred_region
      %1320 = dma.done [#allocation7], 32
    $region33: #{bilstm_encoder_pallas.3} parent=1 // pred_fallthru
      _
    %1321 = vsyncpa [#allocation7], 1

</llo_original>
